<compile_context>
chip_gen: v5e
topology: v5e:2x2
jax: 0.10.0
libtpu: 0.0.40
codegen_flags: <defaults>
</compile_context>

<pallas_src>
import jax
import jax.numpy as jnp
from jax.experimental import pallas as pl
from jax.experimental.pallas import tpu as pltpu

_LANES = 128
_SUBLANES = 8
_TILE_G = 256            # target pooled-rows per grid step in the conv kernels

_VMEM = pl.BlockSpec(memory_space=pltpu.MemorySpace.VMEM)


def _round_up(x, m):
    return (x + m - 1) // m * m


def _cdiv(a, b):
    return -(-a // b)


# ----------------------------- Pallas kernels ------------------------------

def _conv_relu_pool_kernel(x_ref, w_ref, b_ref, o_ref):
    """Fused conv (as im2col matmul) + 2x2 max-pool + bias + ReLU.

    x: (4, TG, Kp) bf16 im2col rows, grouped by pool-window offset (dh, dw).
    w: (Kp, 128) bf16 (Cout zero-padded to 128 lanes), b: (1, 128) f32.
    o: (TG, 128) f32 = maxpool2x2(relu(conv + b)) = relu(max_d(conv_d) + b).
    """
    w = w_ref[...]
    m = None
    for d in range(4):                                    # unrolled: 4 pool offsets
        h = jnp.dot(x_ref[d], w, preferred_element_type=jnp.float32)
        m = h if m is None else jnp.maximum(m, h)         # 2x2 max pool (pre-bias)
    # bias + ReLU applied once (ReLU monotone, bias constant across pool offsets)
    o_ref[...] = jnp.maximum(m + b_ref[...], 0.0)


def _mlp_kernel(x_ref, w1_ref, b1_ref, w2_ref, b2_ref, w3_ref, b3_ref, o_ref):
    """Fused fc1+ReLU -> fc2+ReLU -> fc3; all weights resident in VMEM."""
    h = jnp.dot(x_ref[...], w1_ref[...], preferred_element_type=jnp.float32) + b1_ref[...]
    h = jnp.maximum(h, 0.0).astype(jnp.bfloat16)
    h = jnp.dot(h, w2_ref[...], preferred_element_type=jnp.float32) + b2_ref[...]
    h = jnp.maximum(h, 0.0).astype(jnp.bfloat16)
    o_ref[...] = jnp.dot(h, w3_ref[...], preferred_element_type=jnp.float32) + b3_ref[...]


# --------------------------- conv + relu + pool -----------------------------

def _im2col_pooled(x, KH, KW, g_pad, k_pad):
    """x: (N, H, W, C) NHWC -> (4, g_pad, k_pad) bf16 im2col rows.

    Block d = 2*dh + dw holds, for each pooled pixel (n, oh2, ow2), the patch of
    conv-output pixel (2*oh2 + dh, 2*ow2 + dw); columns ordered (kh, kw, cin).
    Pure XLA glue: strided slices + lane-axis concat, no activation transpose.
    """
    N, H, W, C = x.shape
    OH2, OW2 = (H - KH + 1) // 2, (W - KW + 1) // 2
    G = N * OH2 * OW2
    K = KH * KW * C
    blocks = []
    for dh in range(2):
        for dw in range(2):
            cols = [x[:, dh + kh: dh + kh + 2 * OH2: 2,
                         dw + kw: dw + kw + 2 * OW2: 2, :]
                    for kh in range(KH) for kw in range(KW)]
            blocks.append(jnp.concatenate(cols, axis=-1).reshape(G, K))
    cols4 = jnp.stack(blocks, axis=0)                                # (4, G, K)
    cols4 = jnp.pad(cols4, ((0, 0), (0, g_pad - G), (0, k_pad - K)))
    return cols4.astype(jnp.bfloat16)


def conv2d_relu_pool(x_nhwc, w, b):
    """maxpool2x2(relu(conv2d(x, w) + b)) in one Pallas kernel.

    x_nhwc: (N, H, W, Cin) f32; w: (Cout, Cin, KH, KW) torch layout; b: (Cout,).
    Returns (N, OH//2, OW//2, Cout) f32, NHWC.
    """
    Cout, Cin, KH, KW = w.shape
    N, H, W, C = x_nhwc.shape
    assert C == Cin
    OH2, OW2 = (H - KH + 1) // 2, (W - KW + 1) // 2
    G = N * OH2 * OW2                        # pooled output pixels
    K = Cin * KH * KW
    k_pad = _round_up(K, _LANES)
    n_steps = _cdiv(G, _TILE_G)
    tg = _round_up(_cdiv(G, n_steps), _SUBLANES)
    g_pad = tg * n_steps

    cols4 = _im2col_pooled(x_nhwc, KH, KW, g_pad, k_pad)             # (4, g_pad, k_pad)
    # weight -> rows ordered (kh, kw, cin), cols = Cout zero-padded to 128 lanes
    wmat = w.transpose(2, 3, 1, 0).reshape(K, Cout)
    wmat = jnp.pad(wmat, ((0, k_pad - K), (0, _LANES - Cout))).astype(jnp.bfloat16)
    bvec = jnp.pad(b, (0, _LANES - Cout)).reshape(1, _LANES).astype(jnp.float32)

    cost = pl.CostEstimate(
        flops=2 * 4 * g_pad * k_pad * _LANES,
        transcendentals=0,
        bytes_accessed=cols4.size * 2 + wmat.size * 2 + bvec.size * 4
        + g_pad * _LANES * 4,
    )
    out = pl.pallas_call(
        _conv_relu_pool_kernel,
        out_shape=jax.ShapeDtypeStruct((g_pad, _LANES), jnp.float32),
        grid_spec=pltpu.PrefetchScalarGridSpec(
            num_scalar_prefetch=0,
            grid=(n_steps,),
            in_specs=[
                pl.BlockSpec((4, tg, k_pad), lambda i: (0, i, 0)),
                pl.BlockSpec((k_pad, _LANES), lambda i: (0, 0)),     # resident weight
                pl.BlockSpec((1, _LANES), lambda i: (0, 0)),         # resident bias
            ],
            out_specs=pl.BlockSpec((tg, _LANES), lambda i: (i, 0)),
        ),
        compiler_params=pltpu.CompilerParams(dimension_semantics=("parallel",)),
        cost_estimate=cost,
    )(cols4, wmat, bvec)
    return out[:G].reshape(N, OH2, OW2, _LANES)[..., :Cout]


# ------------------------------- fused MLP head -----------------------------

def mlp_head(x_flat, w1, b1, w2, b2, w3, b3):
    """x_flat: (N, 400) in NHWC-flatten order (w1 already permuted to match).
    Returns (N, 10) f32 logits."""
    N, K = x_flat.shape
    m_pad = _round_up(max(N, _SUBLANES), _SUBLANES)
    k_pad = _round_up(K, _LANES)                           # 400 -> 512
    d1, d2, d3 = w1.shape[0], w2.shape[0], w3.shape[0]     # 120, 84, 10

    xq = jnp.pad(x_flat, ((0, m_pad - N), (0, k_pad - K))).astype(jnp.bfloat16)
    W1 = jnp.pad(w1.T, ((0, k_pad - K), (0, _LANES - d1))).astype(jnp.bfloat16)
    B1 = jnp.pad(b1, (0, _LANES - d1)).reshape(1, _LANES).astype(jnp.float32)
    W2 = jnp.pad(w2.T, ((0, _LANES - w2.shape[1]), (0, _LANES - d2))).astype(jnp.bfloat16)
    B2 = jnp.pad(b2, (0, _LANES - d2)).reshape(1, _LANES).astype(jnp.float32)
    W3 = jnp.pad(w3.T, ((0, _LANES - w3.shape[1]), (0, _LANES - d3))).astype(jnp.bfloat16)
    B3 = jnp.pad(b3, (0, _LANES - d3)).reshape(1, _LANES).astype(jnp.float32)

    cost = pl.CostEstimate(
        flops=2 * m_pad * (k_pad + 2 * _LANES) * _LANES,
        transcendentals=0,
        bytes_accessed=(xq.size + W1.size + W2.size + W3.size) * 2
        + (B1.size + B2.size + B3.size) * 4 + m_pad * _LANES * 4,
    )
    out = pl.pallas_call(
        _mlp_kernel,
        out_shape=jax.ShapeDtypeStruct((m_pad, _LANES), jnp.float32),
        in_specs=[_VMEM] * 7,
        out_specs=_VMEM,
        cost_estimate=cost,
    )(xq, W1, B1, W2, B2, W3, B3)
    return out[:N, :d3]


# ------------------------------ LeNet5 model --------------------------------

def init_params(key):
    """Deterministic synthetic init, PyTorch-style U(-1/sqrt(fan_in), +)."""
    def uniform(k, shape, fan_in):
        bound = 1.0 / (fan_in ** 0.5)
        return jax.random.uniform(k, shape, jnp.float32, -bound, bound)

    ks = jax.random.split(key, 10)
    return {
        "conv1_w": uniform(ks[0], (6, 3, 5, 5), 3 * 25),
        "conv1_b": uniform(ks[1], (6,), 3 * 25),
        "conv2_w": uniform(ks[2], (16, 6, 5, 5), 6 * 25),
        "conv2_b": uniform(ks[3], (16,), 6 * 25),
        "fc1_w": uniform(ks[4], (120, 400), 400),
        "fc1_b": uniform(ks[5], (120,), 400),
        "fc2_w": uniform(ks[6], (84, 120), 120),
        "fc2_b": uniform(ks[7], (84,), 120),
        "fc3_w": uniform(ks[8], (10, 84), 84),
        "fc3_b": uniform(ks[9], (10,), 84),
    }


def lenet5_forward(params, x):
    # x: (N, 3, 32, 32) f32 NCHW at the boundary (matches the PyTorch module).
    xh = jnp.transpose(x, (0, 2, 3, 1))                              # NHWC once
    h = conv2d_relu_pool(xh, params["conv1_w"], params["conv1_b"])   # (N, 14, 14, 6)
    h = conv2d_relu_pool(h, params["conv2_w"], params["conv2_b"])    # (N, 5, 5, 16)
    N = h.shape[0]
    h_flat = h.reshape(N, -1)                                        # (N, 400), (h, w, c) order
    # torch.flatten on NCHW is (c, h, w) order -> fold the permutation into fc1_w.
    fc1_w_hwc = (params["fc1_w"].reshape(120, 16, 5, 5)
                 .transpose(0, 2, 3, 1).reshape(120, 400))
    return mlp_head(h_flat, fc1_w_hwc, params["fc1_b"],
                    params["fc2_w"], params["fc2_b"],
                    params["fc3_w"], params["fc3_b"])


if __name__ == "__main__":
    key = jax.random.PRNGKey(0)
    pkey, xkey = jax.random.split(key)
    params = init_params(pkey)
    # Spatial size fixed by fc1 (400 = 16*5*5) -> 32x32, 3-channel input; batch = 2.
    x = jax.random.normal(xkey, (2, 3, 32, 32), jnp.float32)
    out = jax.jit(lenet5_forward)(params, x)
    out = jax.block_until_ready(out)
    assert out.shape == (2, 10) and out.dtype == jnp.float32
    print("KERNEL_OK")
</pallas_src>

<mosaic_0001>
module attributes {stable_mosaic.version = 11 : i64} {
  func.func @_conv_relu_pool_kernel(%arg0: i32, %arg1: memref<4x200x128xbf16, #tpu.memory_space<vmem>>, %arg2: memref<128x128xbf16, #tpu.memory_space<vmem>>, %arg3: memref<1x128xf32, #tpu.memory_space<vmem>>, %arg4: memref<200x128xf32, #tpu.memory_space<vmem>>) attributes {dimension_semantics = [#tpu.dimension_semantics<parallel>], iteration_bounds = array<i64: 2>, scalar_prefetch = 0 : i64, scratch_operands = 0 : i64, tpu.core_type = #tpu.core_type<tc>, window_params = [{transform_indices = @transform_0, window_bounds = array<i64: 4, 200, 128>}, {pipeline_mode = #tpu.pipeline_mode<synchronous>, transform_indices = @transform_1, window_bounds = array<i64: 128, 128>}, {pipeline_mode = #tpu.pipeline_mode<synchronous>, transform_indices = @transform_2, window_bounds = array<i64: 1, 128>}, {transform_indices = @transform_3, window_bounds = array<i64: 200, 128>}]} {
    %c0 = arith.constant 0 : index
    %c0_0 = arith.constant 0 : index
    %0 = vector.load %arg2[%c0, %c0_0] : memref<128x128xbf16, #tpu.memory_space<vmem>>, vector<128x128xbf16>
    %c0_1 = arith.constant 0 : index
    %c0_2 = arith.constant 0 : index
    %c0_3 = arith.constant 0 : index
    %1 = vector.load %arg1[%c0_1, %c0_2, %c0_3] : memref<4x200x128xbf16, #tpu.memory_space<vmem>>, vector<1x200x128xbf16>
    %2 = vector.shape_cast %1 : vector<1x200x128xbf16> to vector<200x128xbf16>
    %cst = arith.constant dense<0.000000e+00> : vector<200x128xf32>
    %3 = tpu.matmul %2, %0, %cst {dimension_numbers = #tpu.dot_dimension_numbers<[1], [0], [0], [1], [0, 0, 1, 1], [], []>} : vector<200x128xbf16>, vector<128x128xbf16>, vector<200x128xf32> -> vector<200x128xf32>
    %c1 = arith.constant 1 : index
    %c0_4 = arith.constant 0 : index
    %c0_5 = arith.constant 0 : index
    %4 = vector.load %arg1[%c1, %c0_4, %c0_5] : memref<4x200x128xbf16, #tpu.memory_space<vmem>>, vector<1x200x128xbf16>
    %5 = vector.shape_cast %4 : vector<1x200x128xbf16> to vector<200x128xbf16>
    %cst_6 = arith.constant dense<0.000000e+00> : vector<200x128xf32>
    %6 = tpu.matmul %5, %0, %cst_6 {dimension_numbers = #tpu.dot_dimension_numbers<[1], [0], [0], [1], [0, 0, 1, 1], [], []>} : vector<200x128xbf16>, vector<128x128xbf16>, vector<200x128xf32> -> vector<200x128xf32>
    %7 = arith.maximumf %3, %6 : vector<200x128xf32>
    %c2 = arith.constant 2 : index
    %c0_7 = arith.constant 0 : index
    %c0_8 = arith.constant 0 : index
    %8 = vector.load %arg1[%c2, %c0_7, %c0_8] : memref<4x200x128xbf16, #tpu.memory_space<vmem>>, vector<1x200x128xbf16>
    %9 = vector.shape_cast %8 : vector<1x200x128xbf16> to vector<200x128xbf16>
    %cst_9 = arith.constant dense<0.000000e+00> : vector<200x128xf32>
    %10 = tpu.matmul %9, %0, %cst_9 {dimension_numbers = #tpu.dot_dimension_numbers<[1], [0], [0], [1], [0, 0, 1, 1], [], []>} : vector<200x128xbf16>, vector<128x128xbf16>, vector<200x128xf32> -> vector<200x128xf32>
    %11 = arith.maximumf %7, %10 : vector<200x128xf32>
    %c3 = arith.constant 3 : index
    %c0_10 = arith.constant 0 : index
    %c0_11 = arith.constant 0 : index
    %12 = vector.load %arg1[%c3, %c0_10, %c0_11] : memref<4x200x128xbf16, #tpu.memory_space<vmem>>, vector<1x200x128xbf16>
    %13 = vector.shape_cast %12 : vector<1x200x128xbf16> to vector<200x128xbf16>
    %cst_12 = arith.constant dense<0.000000e+00> : vector<200x128xf32>
    %14 = tpu.matmul %13, %0, %cst_12 {dimension_numbers = #tpu.dot_dimension_numbers<[1], [0], [0], [1], [0, 0, 1, 1], [], []>} : vector<200x128xbf16>, vector<128x128xbf16>, vector<200x128xf32> -> vector<200x128xf32>
    %15 = arith.maximumf %11, %14 : vector<200x128xf32>
    %c0_13 = arith.constant 0 : index
    %c0_14 = arith.constant 0 : index
    %16 = vector.load %arg3[%c0_13, %c0_14] : memref<1x128xf32, #tpu.memory_space<vmem>>, vector<1x128xf32>
    %17 = vector.broadcast %16 : vector<1x128xf32> to vector<200x128xf32>
    %18 = arith.addf %15, %17 : vector<200x128xf32>
    %cst_15 = arith.constant 0.000000e+00 : f32
    %19 = vector.broadcast %cst_15 : f32 to vector<200x128xf32>
    %20 = arith.maximumf %18, %19 : vector<200x128xf32>
    %c0_16 = arith.constant 0 : index
    %c0_17 = arith.constant 0 : index
    %21 = vector.load %arg4[%c0_16, %c0_17] : memref<200x128xf32, #tpu.memory_space<vmem>>, vector<200x128xf32>
    tpu.vector_store %arg4[%c0_16, %c0_17], %20 {strides = array<i32>} : memref<200x128xf32, #tpu.memory_space<vmem>>, vector<200x128xf32>,
    return
  }
  func.func @transform_0(%arg0: i32) -> (i32, i32, i32) {
    %c0_i32 = arith.constant 0 : i32
    %c0_i32_0 = arith.constant 0 : i32
    %c0_i32_1 = arith.constant 0 : i32
    return %c0_i32, %arg0, %c0_i32_0 : i32, i32, i32
  }
  func.func @transform_1(%arg0: i32) -> (i32, i32) {
    %c0_i32 = arith.constant 0 : i32
    %c0_i32_0 = arith.constant 0 : i32
    %c0_i32_1 = arith.constant 0 : i32
    return %c0_i32, %c0_i32_0 : i32, i32
  }
  func.func @transform_2(%arg0: i32) -> (i32, i32) {
    %c0_i32 = arith.constant 0 : i32
    %c0_i32_0 = arith.constant 0 : i32
    %c0_i32_1 = arith.constant 0 : i32
    return %c0_i32, %c0_i32_0 : i32, i32
  }
  func.func @transform_3(%arg0: i32) -> (i32, i32) {
    %c0_i32 = arith.constant 0 : i32
    %c0_i32_0 = arith.constant 0 : i32
    return %arg0, %c0_i32 : i32, i32
  }
}

module attributes {stable_mosaic.version = 11 : i64} {
  func.func @_conv_relu_pool_kernel(%arg0: i32, %arg1: memref<4x56x256xbf16, #tpu.memory_space<vmem>>, %arg2: memref<256x128xbf16, #tpu.memory_space<vmem>>, %arg3: memref<1x128xf32, #tpu.memory_space<vmem>>, %arg4: memref<56x128xf32, #tpu.memory_space<vmem>>) attributes {dimension_semantics = [#tpu.dimension_semantics<parallel>], iteration_bounds = array<i64: 1>, scalar_prefetch = 0 : i64, scratch_operands = 0 : i64, tpu.core_type = #tpu.core_type<tc>, window_params = [{transform_indices = @transform_0, window_bounds = array<i64: 4, 56, 256>}, {pipeline_mode = #tpu.pipeline_mode<synchronous>, transform_indices = @transform_1, window_bounds = array<i64: 256, 128>}, {pipeline_mode = #tpu.pipeline_mode<synchronous>, transform_indices = @transform_2, window_bounds = array<i64: 1, 128>}, {transform_indices = @transform_3, window_bounds = array<i64: 56, 128>}]} {
    %c0 = arith.constant 0 : index
    %c0_0 = arith.constant 0 : index
    %0 = vector.load %arg2[%c0, %c0_0] : memref<256x128xbf16, #tpu.memory_space<vmem>>, vector<256x128xbf16>
    %c0_1 = arith.constant 0 : index
    %c0_2 = arith.constant 0 : index
    %c0_3 = arith.constant 0 : index
    %1 = vector.load %arg1[%c0_1, %c0_2, %c0_3] : memref<4x56x256xbf16, #tpu.memory_space<vmem>>, vector<1x56x256xbf16>
    %2 = vector.shape_cast %1 : vector<1x56x256xbf16> to vector<56x256xbf16>
    %cst = arith.constant dense<0.000000e+00> : vector<56x128xf32>
    %3 = tpu.matmul %2, %0, %cst {dimension_numbers = #tpu.dot_dimension_numbers<[1], [0], [0], [1], [0, 0, 1, 1], [], []>} : vector<56x256xbf16>, vector<256x128xbf16>, vector<56x128xf32> -> vector<56x128xf32>
    %c1 = arith.constant 1 : index
    %c0_4 = arith.constant 0 : index
    %c0_5 = arith.constant 0 : index
    %4 = vector.load %arg1[%c1, %c0_4, %c0_5] : memref<4x56x256xbf16, #tpu.memory_space<vmem>>, vector<1x56x256xbf16>
    %5 = vector.shape_cast %4 : vector<1x56x256xbf16> to vector<56x256xbf16>
    %cst_6 = arith.constant dense<0.000000e+00> : vector<56x128xf32>
    %6 = tpu.matmul %5, %0, %cst_6 {dimension_numbers = #tpu.dot_dimension_numbers<[1], [0], [0], [1], [0, 0, 1, 1], [], []>} : vector<56x256xbf16>, vector<256x128xbf16>, vector<56x128xf32> -> vector<56x128xf32>
    %7 = arith.maximumf %3, %6 : vector<56x128xf32>
    %c2 = arith.constant 2 : index
    %c0_7 = arith.constant 0 : index
    %c0_8 = arith.constant 0 : index
    %8 = vector.load %arg1[%c2, %c0_7, %c0_8] : memref<4x56x256xbf16, #tpu.memory_space<vmem>>, vector<1x56x256xbf16>
    %9 = vector.shape_cast %8 : vector<1x56x256xbf16> to vector<56x256xbf16>
    %cst_9 = arith.constant dense<0.000000e+00> : vector<56x128xf32>
    %10 = tpu.matmul %9, %0, %cst_9 {dimension_numbers = #tpu.dot_dimension_numbers<[1], [0], [0], [1], [0, 0, 1, 1], [], []>} : vector<56x256xbf16>, vector<256x128xbf16>, vector<56x128xf32> -> vector<56x128xf32>
    %11 = arith.maximumf %7, %10 : vector<56x128xf32>
    %c3 = arith.constant 3 : index
    %c0_10 = arith.constant 0 : index
    %c0_11 = arith.constant 0 : index
    %12 = vector.load %arg1[%c3, %c0_10, %c0_11] : memref<4x56x256xbf16, #tpu.memory_space<vmem>>, vector<1x56x256xbf16>
    %13 = vector.shape_cast %12 : vector<1x56x256xbf16> to vector<56x256xbf16>
    %cst_12 = arith.constant dense<0.000000e+00> : vector<56x128xf32>
    %14 = tpu.matmul %13, %0, %cst_12 {dimension_numbers = #tpu.dot_dimension_numbers<[1], [0], [0], [1], [0, 0, 1, 1], [], []>} : vector<56x256xbf16>, vector<256x128xbf16>, vector<56x128xf32> -> vector<56x128xf32>
    %15 = arith.maximumf %11, %14 : vector<56x128xf32>
    %c0_13 = arith.constant 0 : index
    %c0_14 = arith.constant 0 : index
    %16 = vector.load %arg3[%c0_13, %c0_14] : memref<1x128xf32, #tpu.memory_space<vmem>>, vector<1x128xf32>
    %17 = vector.broadcast %16 : vector<1x128xf32> to vector<56x128xf32>
    %18 = arith.addf %15, %17 : vector<56x128xf32>
    %cst_15 = arith.constant 0.000000e+00 : f32
    %19 = vector.broadcast %cst_15 : f32 to vector<56x128xf32>
    %20 = arith.maximumf %18, %19 : vector<56x128xf32>
    %c0_16 = arith.constant 0 : index
    %c0_17 = arith.constant 0 : index
    %21 = vector.load %arg4[%c0_16, %c0_17] : memref<56x128xf32, #tpu.memory_space<vmem>>, vector<56x128xf32>
    tpu.vector_store %arg4[%c0_16, %c0_17], %20 {strides = array<i32>} : memref<56x128xf32, #tpu.memory_space<vmem>>, vector<56x128xf32>,
    return
  }
  func.func @transform_0(%arg0: i32) -> (i32, i32, i32) {
    %c0_i32 = arith.constant 0 : i32
    %c0_i32_0 = arith.constant 0 : i32
    %c0_i32_1 = arith.constant 0 : i32
    return %c0_i32, %arg0, %c0_i32_0 : i32, i32, i32
  }
  func.func @transform_1(%arg0: i32) -> (i32, i32) {
    %c0_i32 = arith.constant 0 : i32
    %c0_i32_0 = arith.constant 0 : i32
    %c0_i32_1 = arith.constant 0 : i32
    return %c0_i32, %c0_i32_0 : i32, i32
  }
  func.func @transform_2(%arg0: i32) -> (i32, i32) {
    %c0_i32 = arith.constant 0 : i32
    %c0_i32_0 = arith.constant 0 : i32
    %c0_i32_1 = arith.constant 0 : i32
    return %c0_i32, %c0_i32_0 : i32, i32
  }
  func.func @transform_3(%arg0: i32) -> (i32, i32) {
    %c0_i32 = arith.constant 0 : i32
    %c0_i32_0 = arith.constant 0 : i32
    return %arg0, %c0_i32 : i32, i32
  }
}

module attributes {stable_mosaic.version = 11 : i64} {
  func.func @_mlp_kernel(%arg0: memref<8x512xbf16, #tpu.memory_space<vmem>>, %arg1: memref<512x128xbf16, #tpu.memory_space<vmem>>, %arg2: memref<1x128xf32, #tpu.memory_space<vmem>>, %arg3: memref<128x128xbf16, #tpu.memory_space<vmem>>, %arg4: memref<1x128xf32, #tpu.memory_space<vmem>>, %arg5: memref<128x128xbf16, #tpu.memory_space<vmem>>, %arg6: memref<1x128xf32, #tpu.memory_space<vmem>>, %arg7: memref<8x128xf32, #tpu.memory_space<vmem>>) attributes {dimension_semantics = [], scalar_prefetch = 0 : i64, scratch_operands = 0 : i64, tpu.core_type = #tpu.core_type<tc>} {
    %c0 = arith.constant 0 : index
    %c0_0 = arith.constant 0 : index
    %0 = vector.load %arg0[%c0, %c0_0] : memref<8x512xbf16, #tpu.memory_space<vmem>>, vector<8x512xbf16>
    %c0_1 = arith.constant 0 : index
    %c0_2 = arith.constant 0 : index
    %1 = vector.load %arg1[%c0_1, %c0_2] : memref<512x128xbf16, #tpu.memory_space<vmem>>, vector<512x128xbf16>
    %cst = arith.constant dense<0.000000e+00> : vector<8x128xf32>
    %2 = tpu.matmul %0, %1, %cst {dimension_numbers = #tpu.dot_dimension_numbers<[1], [0], [0], [1], [0, 0, 1, 1], [], []>} : vector<8x512xbf16>, vector<512x128xbf16>, vector<8x128xf32> -> vector<8x128xf32>
    %c0_3 = arith.constant 0 : index
    %c0_4 = arith.constant 0 : index
    %3 = vector.load %arg2[%c0_3, %c0_4] : memref<1x128xf32, #tpu.memory_space<vmem>>, vector<1x128xf32>
    %4 = vector.broadcast %3 : vector<1x128xf32> to vector<8x128xf32>
    %5 = arith.addf %2, %4 : vector<8x128xf32>
    %cst_5 = arith.constant 0.000000e+00 : f32
    %6 = vector.broadcast %cst_5 : f32 to vector<8x128xf32>
    %7 = arith.maximumf %5, %6 : vector<8x128xf32>
    %8 = arith.truncf %7 : vector<8x128xf32> to vector<8x128xbf16>
    %c0_6 = arith.constant 0 : index
    %c0_7 = arith.constant 0 : index
    %9 = vector.load %arg3[%c0_6, %c0_7] : memref<128x128xbf16, #tpu.memory_space<vmem>>, vector<128x128xbf16>
    %cst_8 = arith.constant dense<0.000000e+00> : vector<8x128xf32>
    %10 = tpu.matmul %8, %9, %cst_8 {dimension_numbers = #tpu.dot_dimension_numbers<[1], [0], [0], [1], [0, 0, 1, 1], [], []>} : vector<8x128xbf16>, vector<128x128xbf16>, vector<8x128xf32> -> vector<8x128xf32>
    %c0_9 = arith.constant 0 : index
    %c0_10 = arith.constant 0 : index
    %11 = vector.load %arg4[%c0_9, %c0_10] : memref<1x128xf32, #tpu.memory_space<vmem>>, vector<1x128xf32>
    %12 = vector.broadcast %11 : vector<1x128xf32> to vector<8x128xf32>
    %13 = arith.addf %10, %12 : vector<8x128xf32>
    %cst_11 = arith.constant 0.000000e+00 : f32
    %14 = vector.broadcast %cst_11 : f32 to vector<8x128xf32>
    %15 = arith.maximumf %13, %14 : vector<8x128xf32>
    %16 = arith.truncf %15 : vector<8x128xf32> to vector<8x128xbf16>
    %c0_12 = arith.constant 0 : index
    %c0_13 = arith.constant 0 : index
    %17 = vector.load %arg5[%c0_12, %c0_13] : memref<128x128xbf16, #tpu.memory_space<vmem>>, vector<128x128xbf16>
    %cst_14 = arith.constant dense<0.000000e+00> : vector<8x128xf32>
    %18 = tpu.matmul %16, %17, %cst_14 {dimension_numbers = #tpu.dot_dimension_numbers<[1], [0], [0], [1], [0, 0, 1, 1], [], []>} : vector<8x128xbf16>, vector<128x128xbf16>, vector<8x128xf32> -> vector<8x128xf32>
    %c0_15 = arith.constant 0 : index
    %c0_16 = arith.constant 0 : index
    %19 = vector.load %arg6[%c0_15, %c0_16] : memref<1x128xf32, #tpu.memory_space<vmem>>, vector<1x128xf32>
    %20 = vector.broadcast %19 : vector<1x128xf32> to vector<8x128xf32>
    %21 = arith.addf %18, %20 : vector<8x128xf32>
    %c0_17 = arith.constant 0 : index
    %c0_18 = arith.constant 0 : index
    %22 = vector.load %arg7[%c0_17, %c0_18] : memref<8x128xf32, #tpu.memory_space<vmem>>, vector<8x128xf32>
    tpu.vector_store %arg7[%c0_17, %c0_18], %21 {strides = array<i32>} : memref<8x128xf32, #tpu.memory_space<vmem>>, vector<8x128xf32>,
    return
  }
}

</mosaic_0001>

<llo_original>
// kernel: lenet5_forward.3
$region0: #{lenet5_forward.3}
  #allocation0 [shape = 'u32[]', space=smem, size = 0x4, offset = 0x4, fixed_abs, tag = 'smem constant byte address 0x4 - core index']
  #allocation1 [shape = 'u32[72,128]{1,0:T(1,128)}', space=vmem, size = 0x9000, scoped, tag = 'internal scratch']
  %s0 = inlined_call_operand.vmem [shape: bf16[4,400,128], index: 0, kind: input, shape index: {}]
  %s1 = inlined_call_operand.vmem [shape: bf16[128,128], index: 1, kind: input, shape index: {}]
  %s2 = inlined_call_operand.vmem [shape: f32[1,128], index: 2, kind: input, shape index: {}]
  %s3 = inlined_call_operand.vmem [shape: f32[400,128], index: 3, kind: output, shape index: {}]
  %s4 = sld [smem:[#allocation0]]
  $region86: #{lenet5_forward.3} parent=0
    _
  %s6 = ssub.s32 1, %s4
  %s7 = scalar_select 0, %s6, %s4
  $region1: #{lenet5_forward.3} parent=0
    #allocation2 [shape = 'u8[409600]{0}', space=vmem, size = 0x64000, scoped, tag = 'input window, operand 0']
    loop: start=0, step=1, limit=4
    $region2: #{lenet5_forward.3} parent=1 // loop_pre_header
      _
    $region3: #{lenet5_forward.3} parent=1 // loop_header
      %s9 = sphi 0, %s13
      %p10 = scmp.ge.s32.totalorder %s9, 4
      %s19 = sphi 0, %s21
      %s22 = sphi 0, %s19
      %s23 = sphi 0, %s22
      %s39 = sphi 0, %s23
      %s43 = sphi 0, %s43
      %s45 = sphi 0, %s43
      %s46 = sphi 0, %s45
      %s60 = sphi 0, %s46
      %s64 = sphi 0, %s64
      %s66 = sphi 0, %s64
      %s67 = sphi 0, %s66
      %s81 = sphi 0, %s67
      %s87 = sphi 0, %s89
      %s90 = sphi 0, %s87
      %s91 = sphi 0, %s90
      %s107 = sphi 0, %s91
    $region4: #{lenet5_forward.3} parent=1 // loop_header_branch
      %12 = sbr.rel (%p10) target = $region8
    $region5: #{lenet5_forward.3} parent=1 // loop_body
      %s14 = ssub.s32 %s9, 1
      %s15 = ssub.s32 %s9, 2
      %s16 = sadd.s32 %s9, 1
      %s17 = ssub.s32 %s9, %s16
      %p18 = scmp.eq.s32.totalorder %s17, 0
      %s20 = sadd.s32 %s19, 1
      %s21 = scalar_select %p18, %s19, %s20
      %p24 = pneg %p18
      %p25 = scmp.eq.s32.totalorder %s9, 1
      %p26 = por %p24, %p25
      %p27 = scmp.ne.s32.totalorder %s19, %s22
      %p28 = scmp.eq.s32.totalorder %s9, 0
      %p29 = por %p27, %p28
      %p30 = scmp.ne.s32.totalorder %s19, %s22
      %p31 = scmp.eq.s32.totalorder %s14, 1
      %p32 = por %p30, %p31
      %p33 = scmp.ne.s32.totalorder %s22, %s23
      %p34 = scmp.eq.s32.totalorder %s14, 0
      %p35 = por %p33, %p34
      %p36 = scmp.ne.s32.totalorder %s22, %s23
      %p37 = scmp.eq.s32.totalorder %s15, 1
      %p38 = por %p36, %p37
      %p40 = scmp.ne.s32.totalorder %s23, %s39
      %p41 = scmp.eq.s32.totalorder %s15, 0
      %p42 = por %p40, %p41
      %s44 = sadd.s32 %s43, 1
      %p47 = scmp.eq.s32.totalorder %s9, 1
      %p48 = scmp.ne.s32.totalorder %s43, %s45
      %p49 = scmp.eq.s32.totalorder %s9, 0
      %p50 = por %p48, %p49
      %p51 = scmp.ne.s32.totalorder %s43, %s45
      %p52 = scmp.eq.s32.totalorder %s14, 1
      %p53 = por %p51, %p52
      %p54 = scmp.ne.s32.totalorder %s45, %s46
      %p55 = scmp.eq.s32.totalorder %s14, 0
      %p56 = por %p54, %p55
      %p57 = scmp.ne.s32.totalorder %s45, %s46
      %p58 = scmp.eq.s32.totalorder %s15, 1
      %p59 = por %p57, %p58
      %p61 = scmp.ne.s32.totalorder %s46, %s60
      %p62 = scmp.eq.s32.totalorder %s15, 0
      %p63 = por %p61, %p62
      %s65 = sadd.s32 %s64, 1
      %p68 = scmp.eq.s32.totalorder %s9, 1
      %p69 = scmp.ne.s32.totalorder %s64, %s66
      %p70 = scmp.eq.s32.totalorder %s9, 0
      %p71 = por %p69, %p70
      %p72 = scmp.ne.s32.totalorder %s64, %s66
      %p73 = scmp.eq.s32.totalorder %s14, 1
      %p74 = por %p72, %p73
      %p75 = scmp.ne.s32.totalorder %s66, %s67
      %p76 = scmp.eq.s32.totalorder %s14, 0
      %p77 = por %p75, %p76
      %p78 = scmp.ne.s32.totalorder %s66, %s67
      %p79 = scmp.eq.s32.totalorder %s15, 1
      %p80 = por %p78, %p79
      %p82 = scmp.ne.s32.totalorder %s67, %s81
      %p83 = scmp.eq.s32.totalorder %s15, 0
      %p84 = por %p82, %p83
      %s85 = ssub.s32 %s9, %s16
      %p86 = scmp.eq.s32.totalorder %s85, 0
      %s88 = sadd.s32 %s87, 1
      %s89 = scalar_select %p86, %s87, %s88
      %p92 = pneg %p86
      %p93 = scmp.eq.s32.totalorder %s9, 1
      %p94 = por %p92, %p93
      %p95 = scmp.ne.s32.totalorder %s87, %s90
      %p96 = scmp.eq.s32.totalorder %s9, 0
      %p97 = por %p95, %p96
      %p98 = scmp.ne.s32.totalorder %s87, %s90
      %p99 = scmp.eq.s32.totalorder %s14, 1
      %p100 = por %p98, %p99
      %p101 = scmp.ne.s32.totalorder %s90, %s91
      %p102 = scmp.eq.s32.totalorder %s14, 0
      %p103 = por %p101, %p102
      %p104 = scmp.ne.s32.totalorder %s90, %s91
      %p105 = scmp.eq.s32.totalorder %s15, 1
      %p106 = por %p104, %p105
      %p108 = scmp.ne.s32.totalorder %s91, %s107
      %p109 = scmp.eq.s32.totalorder %s15, 0
      %p110 = por %p108, %p109
      %p111 = scmp.le.s32.totalorder 1, %s9
      %p112 = scmp.lt.s32.totalorder %s9, 3
      %p113 = pnand %p111, %p112
      %p114 = pneg %p113
      // Predicated region
      $region9: #{lenet5_forward.3} parent=5 // pred_check
        _
      $region10: #{lenet5_forward.3} parent=5 // pred_check_branch
        %116 = sbr.rel (%p113) target = $region12
      $region11: #{lenet5_forward.3} parent=5 // pred_region
        %s117 = ssub.s32 %s9, 1
        // Predicated region
        $region13: #{lenet5_forward.3} parent=11 // pred_check
          %p118 = pneg %p56
        $region14: #{lenet5_forward.3} parent=11 // pred_check_branch
          %120 = sbr.rel (%p118) target = $region16
        $region15: #{lenet5_forward.3} parent=11 // pred_region
          _
        $region16: #{lenet5_forward.3} parent=11 // pred_fallthru
          _
        // Predicated region
        $region17: #{lenet5_forward.3} parent=11 // pred_check
          %p121 = pneg %p77
        $region18: #{lenet5_forward.3} parent=11 // pred_check_branch
          %123 = sbr.rel (%p121) target = $region20
        $region19: #{lenet5_forward.3} parent=11 // pred_region
          _
        $region20: #{lenet5_forward.3} parent=11 // pred_fallthru
          _
      $region12: #{lenet5_forward.3} parent=5 // pred_fallthru
        _
      %p124 = scmp.lt.s32.totalorder %s9, 2
      // Predicated region
      $region21: #{lenet5_forward.3} parent=5 // pred_check
        %p125 = pneg %p124
      $region22: #{lenet5_forward.3} parent=5 // pred_check_branch
        %127 = sbr.rel (%p125) target = $region24
      $region23: #{lenet5_forward.3} parent=5 // pred_region
        // Predicated region
        $region25: #{lenet5_forward.3} parent=23 // pred_check
          %p128 = pneg %p29
        $region26: #{lenet5_forward.3} parent=23 // pred_check_branch
          %130 = sbr.rel (%p128) target = $region28
        $region27: #{lenet5_forward.3} parent=23 // pred_region
          %s131 = sand.u32 %s19, 1
          %s132 = sand.u32 %s19, 1
          %s133 = smul.addr %s132, 400
          %s134 = scalar_lea.vmem [#allocation2], %s133
          %s135 = smul.u32 25, %s9
          %s136 = smul.addr %s135, 4
          %s137 = scalar_lea.vmem %s0, %s136
          // Predicated region
          $region29: #{lenet5_forward.3} parent=27 // pred_check
            _
          $region30: #{lenet5_forward.3} parent=27 // pred_check_branch
            %139 = sbr.rel (0) target = $region32
          $region31: #{lenet5_forward.3} parent=27 // pred_region
            // Predicated region
            $region33: #{lenet5_forward.3} parent=31 // pred_check
              _
            $region34: #{lenet5_forward.3} parent=31 // pred_check_branch
              %141 = sbr.rel target = $region36
            $region35: #{lenet5_forward.3} parent=31 // pred_region
              // Predicated region
              $region48: #{lenet5_forward.3} parent=35 // pred_check
                _
              $region49: #{lenet5_forward.3} parent=35 // pred_check_branch
                %355 = sbr.rel (0) target = $region51
              $region50: #{lenet5_forward.3} parent=35 // pred_region
                loop: start=0, step=1, limit=1
                $region52: #{lenet5_forward.3} parent=50 // loop_pre_header
                  _
                $region53: #{lenet5_forward.3} parent=50 // loop_header
                  %s357 = sphi 0, %s361
                  %p358 = scmp.ge.s32.totalorder %s357, 1
                  %s362 = sphi %s137, %s137
                  %s363 = sphi %s134, %s134
                $region54: #{lenet5_forward.3} parent=50 // loop_header_branch
                  %360 = sbr.rel (%p358) target = $region58
                $region55: #{lenet5_forward.3} parent=50 // loop_body
                  _
                $region56: #{lenet5_forward.3} parent=50 // loop_footer
                  %s361 = sadd.s32 1, %s357
                $region57: #{lenet5_forward.3} parent=50 // loop_footer_branch
                  %356 = sbr.rel target = $region53
                $region58: #{lenet5_forward.3} parent=50 // loop_exit
                  _
                %s365 = ssub.s32 16, 1
                loop: start=0, step=1, limit=1
                $region59: #{lenet5_forward.3} parent=50 // loop_pre_header
                  _
                $region60: #{lenet5_forward.3} parent=50 // loop_header
                  %s367 = sphi 0, %s371
                  %p368 = scmp.ge.s32.totalorder %s367, 1
                  %s372 = sphi %s137, %s137
                  %s373 = sphi %s134, %s134
                $region61: #{lenet5_forward.3} parent=50 // loop_header_branch
                  %370 = sbr.rel (%p368) target = $region65
                $region62: #{lenet5_forward.3} parent=50 // loop_body
                  %v374 = vld [vmem:[%s372] sm:%s365]
                  %375 = vst [vmem:[%s373] sm:%s365] %v374
                  %v376 = vld [vmem:[%s372 + $0x4] sm:%s365]
                  %377 = vst [vmem:[%s373 + $0x4] sm:%s365] %v376
                  %v378 = vld [vmem:[%s372 + $0x8] sm:%s365]
                  %379 = vst [vmem:[%s373 + $0x8] sm:%s365] %v378
                  %v380 = vld [vmem:[%s372 + $0xc] sm:%s365]
                  %381 = vst [vmem:[%s373 + $0xc] sm:%s365] %v380
                  %v382 = vld [vmem:[%s372 + $0x10] sm:%s365]
                  %383 = vst [vmem:[%s373 + $0x10] sm:%s365] %v382
                  %v384 = vld [vmem:[%s372 + $0x14] sm:%s365]
                  %385 = vst [vmem:[%s373 + $0x14] sm:%s365] %v384
                  %v386 = vld [vmem:[%s372 + $0x18] sm:%s365]
                  %387 = vst [vmem:[%s373 + $0x18] sm:%s365] %v386
                  %v388 = vld [vmem:[%s372 + $0x1c] sm:%s365]
                  %389 = vst [vmem:[%s373 + $0x1c] sm:%s365] %v388
                  %v390 = vld [vmem:[%s372 + $0x20] sm:%s365]
                  %391 = vst [vmem:[%s373 + $0x20] sm:%s365] %v390
                  %v392 = vld [vmem:[%s372 + $0x24] sm:%s365]
                  %393 = vst [vmem:[%s373 + $0x24] sm:%s365] %v392
                  %v394 = vld [vmem:[%s372 + $0x28] sm:%s365]
                  %395 = vst [vmem:[%s373 + $0x28] sm:%s365] %v394
                  %v396 = vld [vmem:[%s372 + $0x2c] sm:%s365]
                  %397 = vst [vmem:[%s373 + $0x2c] sm:%s365] %v396
                  %v398 = vld [vmem:[%s372 + $0x30] sm:%s365]
                  %399 = vst [vmem:[%s373 + $0x30] sm:%s365] %v398
                  %v400 = vld [vmem:[%s372 + $0x34] sm:%s365]
                  %401 = vst [vmem:[%s373 + $0x34] sm:%s365] %v400
                  %v402 = vld [vmem:[%s372 + $0x38] sm:%s365]
                  %403 = vst [vmem:[%s373 + $0x38] sm:%s365] %v402
                  %v404 = vld [vmem:[%s372 + $0x3c] sm:%s365]
                  %405 = vst [vmem:[%s373 + $0x3c] sm:%s365] %v404
                  %v406 = vld [vmem:[%s372 + $0x40] sm:%s365]
                  %407 = vst [vmem:[%s373 + $0x40] sm:%s365] %v406
                  %v408 = vld [vmem:[%s372 + $0x44] sm:%s365]
                  %409 = vst [vmem:[%s373 + $0x44] sm:%s365] %v408
                  %v410 = vld [vmem:[%s372 + $0x48] sm:%s365]
                  %411 = vst [vmem:[%s373 + $0x48] sm:%s365] %v410
                  %v412 = vld [vmem:[%s372 + $0x4c] sm:%s365]
                  %413 = vst [vmem:[%s373 + $0x4c] sm:%s365] %v412
                  %v414 = vld [vmem:[%s372 + $0x50] sm:%s365]
                  %415 = vst [vmem:[%s373 + $0x50] sm:%s365] %v414
                  %v416 = vld [vmem:[%s372 + $0x54] sm:%s365]
                  %417 = vst [vmem:[%s373 + $0x54] sm:%s365] %v416
                  %v418 = vld [vmem:[%s372 + $0x58] sm:%s365]
                  %419 = vst [vmem:[%s373 + $0x58] sm:%s365] %v418
                  %v420 = vld [vmem:[%s372 + $0x5c] sm:%s365]
                  %421 = vst [vmem:[%s373 + $0x5c] sm:%s365] %v420
                  %v422 = vld [vmem:[%s372 + $0x60] sm:%s365]
                  %423 = vst [vmem:[%s373 + $0x60] sm:%s365] %v422
                  %v424 = vld [vmem:[%s372 + $0xc8] sm:%s365]
                  %425 = vst [vmem:[%s373 + $0x64] sm:%s365] %v424
                  %v426 = vld [vmem:[%s372 + $0xcc] sm:%s365]
                  %427 = vst [vmem:[%s373 + $0x68] sm:%s365] %v426
                  %v428 = vld [vmem:[%s372 + $0xd0] sm:%s365]
                  %429 = vst [vmem:[%s373 + $0x6c] sm:%s365] %v428
                  %v430 = vld [vmem:[%s372 + $0xd4] sm:%s365]
                  %431 = vst [vmem:[%s373 + $0x70] sm:%s365] %v430
                  %v432 = vld [vmem:[%s372 + $0xd8] sm:%s365]
                  %433 = vst [vmem:[%s373 + $0x74] sm:%s365] %v432
                  %v434 = vld [vmem:[%s372 + $0xdc] sm:%s365]
                  %435 = vst [vmem:[%s373 + $0x78] sm:%s365] %v434
                  %v436 = vld [vmem:[%s372 + $0xe0] sm:%s365]
                  %437 = vst [vmem:[%s373 + $0x7c] sm:%s365] %v436
                  %v438 = vld [vmem:[%s372 + $0xe4] sm:%s365]
                  %439 = vst [vmem:[%s373 + $0x80] sm:%s365] %v438
                  %v440 = vld [vmem:[%s372 + $0xe8] sm:%s365]
                  %441 = vst [vmem:[%s373 + $0x84] sm:%s365] %v440
                  %v442 = vld [vmem:[%s372 + $0xec] sm:%s365]
                  %443 = vst [vmem:[%s373 + $0x88] sm:%s365] %v442
                  %v444 = vld [vmem:[%s372 + $0xf0] sm:%s365]
                  %445 = vst [vmem:[%s373 + $0x8c] sm:%s365] %v444
                  %v446 = vld [vmem:[%s372 + $0xf4] sm:%s365]
                  %447 = vst [vmem:[%s373 + $0x90] sm:%s365] %v446
                  %v448 = vld [vmem:[%s372 + $0xf8] sm:%s365]
                  %449 = vst [vmem:[%s373 + $0x94] sm:%s365] %v448
                  %v450 = vld [vmem:[%s372 + $0xfc] sm:%s365]
                  %451 = vst [vmem:[%s373 + $0x98] sm:%s365] %v450
                  %v452 = vld [vmem:[%s372 + $0x100] sm:%s365]
                  %453 = vst [vmem:[%s373 + $0x9c] sm:%s365] %v452
                  %v454 = vld [vmem:[%s372 + $0x104] sm:%s365]
                  %455 = vst [vmem:[%s373 + $0xa0] sm:%s365] %v454
                  %v456 = vld [vmem:[%s372 + $0x108] sm:%s365]
                  %457 = vst [vmem:[%s373 + $0xa4] sm:%s365] %v456
                  %v458 = vld [vmem:[%s372 + $0x10c] sm:%s365]
                  %459 = vst [vmem:[%s373 + $0xa8] sm:%s365] %v458
                  %v460 = vld [vmem:[%s372 + $0x110] sm:%s365]
                  %461 = vst [vmem:[%s373 + $0xac] sm:%s365] %v460
                  %v462 = vld [vmem:[%s372 + $0x114] sm:%s365]
                  %463 = vst [vmem:[%s373 + $0xb0] sm:%s365] %v462
                  %v464 = vld [vmem:[%s372 + $0x118] sm:%s365]
                  %465 = vst [vmem:[%s373 + $0xb4] sm:%s365] %v464
                  %v466 = vld [vmem:[%s372 + $0x11c] sm:%s365]
                  %467 = vst [vmem:[%s373 + $0xb8] sm:%s365] %v466
                  %v468 = vld [vmem:[%s372 + $0x120] sm:%s365]
                  %469 = vst [vmem:[%s373 + $0xbc] sm:%s365] %v468
                  %v470 = vld [vmem:[%s372 + $0x124] sm:%s365]
                  %471 = vst [vmem:[%s373 + $0xc0] sm:%s365] %v470
                  %v472 = vld [vmem:[%s372 + $0x128] sm:%s365]
                  %473 = vst [vmem:[%s373 + $0xc4] sm:%s365] %v472
                  %v474 = vld [vmem:[%s372 + $0x190] sm:%s365]
                  %475 = vst [vmem:[%s373 + $0xc8] sm:%s365] %v474
                  %v476 = vld [vmem:[%s372 + $0x194] sm:%s365]
                  %477 = vst [vmem:[%s373 + $0xcc] sm:%s365] %v476
                  %v478 = vld [vmem:[%s372 + $0x198] sm:%s365]
                  %479 = vst [vmem:[%s373 + $0xd0] sm:%s365] %v478
                  %v480 = vld [vmem:[%s372 + $0x19c] sm:%s365]
                  %481 = vst [vmem:[%s373 + $0xd4] sm:%s365] %v480
                  %v482 = vld [vmem:[%s372 + $0x1a0] sm:%s365]
                  %483 = vst [vmem:[%s373 + $0xd8] sm:%s365] %v482
                  %v484 = vld [vmem:[%s372 + $0x1a4] sm:%s365]
                  %485 = vst [vmem:[%s373 + $0xdc] sm:%s365] %v484
                  %v486 = vld [vmem:[%s372 + $0x1a8] sm:%s365]
                  %487 = vst [vmem:[%s373 + $0xe0] sm:%s365] %v486
                  %v488 = vld [vmem:[%s372 + $0x1ac] sm:%s365]
                  %489 = vst [vmem:[%s373 + $0xe4] sm:%s365] %v488
                  %v490 = vld [vmem:[%s372 + $0x1b0] sm:%s365]
                  %491 = vst [vmem:[%s373 + $0xe8] sm:%s365] %v490
                  %v492 = vld [vmem:[%s372 + $0x1b4] sm:%s365]
                  %493 = vst [vmem:[%s373 + $0xec] sm:%s365] %v492
                  %v494 = vld [vmem:[%s372 + $0x1b8] sm:%s365]
                  %495 = vst [vmem:[%s373 + $0xf0] sm:%s365] %v494
                  %v496 = vld [vmem:[%s372 + $0x1bc] sm:%s365]
                  %497 = vst [vmem:[%s373 + $0xf4] sm:%s365] %v496
                  %v498 = vld [vmem:[%s372 + $0x1c0] sm:%s365]
                  %499 = vst [vmem:[%s373 + $0xf8] sm:%s365] %v498
                  %v500 = vld [vmem:[%s372 + $0x1c4] sm:%s365]
                  %501 = vst [vmem:[%s373 + $0xfc] sm:%s365] %v500
                  %v502 = vld [vmem:[%s372 + $0x1c8] sm:%s365]
                  %503 = vst [vmem:[%s373 + $0x100] sm:%s365] %v502
                  %v504 = vld [vmem:[%s372 + $0x1cc] sm:%s365]
                  %505 = vst [vmem:[%s373 + $0x104] sm:%s365] %v504
                  %v506 = vld [vmem:[%s372 + $0x1d0] sm:%s365]
                  %507 = vst [vmem:[%s373 + $0x108] sm:%s365] %v506
                  %v508 = vld [vmem:[%s372 + $0x1d4] sm:%s365]
                  %509 = vst [vmem:[%s373 + $0x10c] sm:%s365] %v508
                  %v510 = vld [vmem:[%s372 + $0x1d8] sm:%s365]
                  %511 = vst [vmem:[%s373 + $0x110] sm:%s365] %v510
                  %v512 = vld [vmem:[%s372 + $0x1dc] sm:%s365]
                  %513 = vst [vmem:[%s373 + $0x114] sm:%s365] %v512
                  %v514 = vld [vmem:[%s372 + $0x1e0] sm:%s365]
                  %515 = vst [vmem:[%s373 + $0x118] sm:%s365] %v514
                  %v516 = vld [vmem:[%s372 + $0x1e4] sm:%s365]
                  %517 = vst [vmem:[%s373 + $0x11c] sm:%s365] %v516
                  %v518 = vld [vmem:[%s372 + $0x1e8] sm:%s365]
                  %519 = vst [vmem:[%s373 + $0x120] sm:%s365] %v518
                  %v520 = vld [vmem:[%s372 + $0x1ec] sm:%s365]
                  %521 = vst [vmem:[%s373 + $0x124] sm:%s365] %v520
                  %v522 = vld [vmem:[%s372 + $0x1f0] sm:%s365]
                  %523 = vst [vmem:[%s373 + $0x128] sm:%s365] %v522
                  %v524 = vld [vmem:[%s372 + $0x258] sm:%s365]
                  %525 = vst [vmem:[%s373 + $0x12c] sm:%s365] %v524
                  %v526 = vld [vmem:[%s372 + $0x25c] sm:%s365]
                  %527 = vst [vmem:[%s373 + $0x130] sm:%s365] %v526
                  %v528 = vld [vmem:[%s372 + $0x260] sm:%s365]
                  %529 = vst [vmem:[%s373 + $0x134] sm:%s365] %v528
                  %v530 = vld [vmem:[%s372 + $0x264] sm:%s365]
                  %531 = vst [vmem:[%s373 + $0x138] sm:%s365] %v530
                  %v532 = vld [vmem:[%s372 + $0x268] sm:%s365]
                  %533 = vst [vmem:[%s373 + $0x13c] sm:%s365] %v532
                  %v534 = vld [vmem:[%s372 + $0x26c] sm:%s365]
                  %535 = vst [vmem:[%s373 + $0x140] sm:%s365] %v534
                  %v536 = vld [vmem:[%s372 + $0x270] sm:%s365]
                  %537 = vst [vmem:[%s373 + $0x144] sm:%s365] %v536
                  %v538 = vld [vmem:[%s372 + $0x274] sm:%s365]
                  %539 = vst [vmem:[%s373 + $0x148] sm:%s365] %v538
                  %v540 = vld [vmem:[%s372 + $0x278] sm:%s365]
                  %541 = vst [vmem:[%s373 + $0x14c] sm:%s365] %v540
                  %v542 = vld [vmem:[%s372 + $0x27c] sm:%s365]
                  %543 = vst [vmem:[%s373 + $0x150] sm:%s365] %v542
                  %v544 = vld [vmem:[%s372 + $0x280] sm:%s365]
                  %545 = vst [vmem:[%s373 + $0x154] sm:%s365] %v544
                  %v546 = vld [vmem:[%s372 + $0x284] sm:%s365]
                  %547 = vst [vmem:[%s373 + $0x158] sm:%s365] %v546
                  %v548 = vld [vmem:[%s372 + $0x288] sm:%s365]
                  %549 = vst [vmem:[%s373 + $0x15c] sm:%s365] %v548
                  %v550 = vld [vmem:[%s372 + $0x28c] sm:%s365]
                  %551 = vst [vmem:[%s373 + $0x160] sm:%s365] %v550
                  %v552 = vld [vmem:[%s372 + $0x290] sm:%s365]
                  %553 = vst [vmem:[%s373 + $0x164] sm:%s365] %v552
                  %v554 = vld [vmem:[%s372 + $0x294] sm:%s365]
                  %555 = vst [vmem:[%s373 + $0x168] sm:%s365] %v554
                  %v556 = vld [vmem:[%s372 + $0x298] sm:%s365]
                  %557 = vst [vmem:[%s373 + $0x16c] sm:%s365] %v556
                  %v558 = vld [vmem:[%s372 + $0x29c] sm:%s365]
                  %559 = vst [vmem:[%s373 + $0x170] sm:%s365] %v558
                  %v560 = vld [vmem:[%s372 + $0x2a0] sm:%s365]
                  %561 = vst [vmem:[%s373 + $0x174] sm:%s365] %v560
                  %v562 = vld [vmem:[%s372 + $0x2a4] sm:%s365]
                  %563 = vst [vmem:[%s373 + $0x178] sm:%s365] %v562
                  %v564 = vld [vmem:[%s372 + $0x2a8] sm:%s365]
                  %565 = vst [vmem:[%s373 + $0x17c] sm:%s365] %v564
                  %v566 = vld [vmem:[%s372 + $0x2ac] sm:%s365]
                  %567 = vst [vmem:[%s373 + $0x180] sm:%s365] %v566
                  %v568 = vld [vmem:[%s372 + $0x2b0] sm:%s365]
                  %569 = vst [vmem:[%s373 + $0x184] sm:%s365] %v568
                  %v570 = vld [vmem:[%s372 + $0x2b4] sm:%s365]
                  %571 = vst [vmem:[%s373 + $0x188] sm:%s365] %v570
                  %v572 = vld [vmem:[%s372 + $0x2b8] sm:%s365]
                  %573 = vst [vmem:[%s373 + $0x18c] sm:%s365] %v572
                $region63: #{lenet5_forward.3} parent=50 // loop_footer
                  %s371 = sadd.s32 1, %s367
                $region64: #{lenet5_forward.3} parent=50 // loop_footer_branch
                  %366 = sbr.rel target = $region60
                $region65: #{lenet5_forward.3} parent=50 // loop_exit
                  _
              $region51: #{lenet5_forward.3} parent=35 // pred_fallthru
                _
            $region36: #{lenet5_forward.3} parent=31 // pred_fallthru
              _
            // Predicated region
            $region37: #{lenet5_forward.3} parent=31 // pred_check
              _
            $region38: #{lenet5_forward.3} parent=31 // pred_check_branch
              %143 = sbr.rel (0) target = $region40
            $region39: #{lenet5_forward.3} parent=31 // pred_region
              %s145 = ssub.s32 16, 1
              loop: start=0, step=1, limit=1
              $region41: #{lenet5_forward.3} parent=39 // loop_pre_header
                _
              $region42: #{lenet5_forward.3} parent=39 // loop_header
                %s147 = sphi 0, %s151
                %p148 = scmp.ge.s32.totalorder %s147, 1
                %s152 = sphi %s137, %s137
                %s153 = sphi %s134, %s134
              $region43: #{lenet5_forward.3} parent=39 // loop_header_branch
                %150 = sbr.rel (%p148) target = $region47
              $region44: #{lenet5_forward.3} parent=39 // loop_body
                %v154 = vld [vmem:[%s152] sm:%s145]
                %155 = vst [vmem:[%s153] sm:%s145] %v154
                %v156 = vld [vmem:[%s152 + $0x4] sm:%s145]
                %157 = vst [vmem:[%s153 + $0x4] sm:%s145] %v156
                %v158 = vld [vmem:[%s152 + $0x8] sm:%s145]
                %159 = vst [vmem:[%s153 + $0x8] sm:%s145] %v158
                %v160 = vld [vmem:[%s152 + $0xc] sm:%s145]
                %161 = vst [vmem:[%s153 + $0xc] sm:%s145] %v160
                %v162 = vld [vmem:[%s152 + $0x10] sm:%s145]
                %163 = vst [vmem:[%s153 + $0x10] sm:%s145] %v162
                %v164 = vld [vmem:[%s152 + $0x14] sm:%s145]
                %165 = vst [vmem:[%s153 + $0x14] sm:%s145] %v164
                %v166 = vld [vmem:[%s152 + $0x18] sm:%s145]
                %167 = vst [vmem:[%s153 + $0x18] sm:%s145] %v166
                %v168 = vld [vmem:[%s152 + $0x1c] sm:%s145]
                %169 = vst [vmem:[%s153 + $0x1c] sm:%s145] %v168
                %v170 = vld [vmem:[%s152 + $0x20] sm:%s145]
                %171 = vst [vmem:[%s153 + $0x20] sm:%s145] %v170
                %v172 = vld [vmem:[%s152 + $0x24] sm:%s145]
                %173 = vst [vmem:[%s153 + $0x24] sm:%s145] %v172
                %v174 = vld [vmem:[%s152 + $0x28] sm:%s145]
                %175 = vst [vmem:[%s153 + $0x28] sm:%s145] %v174
                %v176 = vld [vmem:[%s152 + $0x2c] sm:%s145]
                %177 = vst [vmem:[%s153 + $0x2c] sm:%s145] %v176
                %v178 = vld [vmem:[%s152 + $0x30] sm:%s145]
                %179 = vst [vmem:[%s153 + $0x30] sm:%s145] %v178
                %v180 = vld [vmem:[%s152 + $0x34] sm:%s145]
                %181 = vst [vmem:[%s153 + $0x34] sm:%s145] %v180
                %v182 = vld [vmem:[%s152 + $0x38] sm:%s145]
                %183 = vst [vmem:[%s153 + $0x38] sm:%s145] %v182
                %v184 = vld [vmem:[%s152 + $0x3c] sm:%s145]
                %185 = vst [vmem:[%s153 + $0x3c] sm:%s145] %v184
                %v186 = vld [vmem:[%s152 + $0x40] sm:%s145]
                %187 = vst [vmem:[%s153 + $0x40] sm:%s145] %v186
                %v188 = vld [vmem:[%s152 + $0x44] sm:%s145]
                %189 = vst [vmem:[%s153 + $0x44] sm:%s145] %v188
                %v190 = vld [vmem:[%s152 + $0x48] sm:%s145]
                %191 = vst [vmem:[%s153 + $0x48] sm:%s145] %v190
                %v192 = vld [vmem:[%s152 + $0x4c] sm:%s145]
                %193 = vst [vmem:[%s153 + $0x4c] sm:%s145] %v192
                %v194 = vld [vmem:[%s152 + $0x50] sm:%s145]
                %195 = vst [vmem:[%s153 + $0x50] sm:%s145] %v194
                %v196 = vld [vmem:[%s152 + $0x54] sm:%s145]
                %197 = vst [vmem:[%s153 + $0x54] sm:%s145] %v196
                %v198 = vld [vmem:[%s152 + $0x58] sm:%s145]
                %199 = vst [vmem:[%s153 + $0x58] sm:%s145] %v198
                %v200 = vld [vmem:[%s152 + $0x5c] sm:%s145]
                %201 = vst [vmem:[%s153 + $0x5c] sm:%s145] %v200
                %v202 = vld [vmem:[%s152 + $0x60] sm:%s145]
                %203 = vst [vmem:[%s153 + $0x60] sm:%s145] %v202
                %v204 = vld [vmem:[%s152 + $0xc8] sm:%s145]
                %205 = vst [vmem:[%s153 + $0x64] sm:%s145] %v204
                %v206 = vld [vmem:[%s152 + $0xcc] sm:%s145]
                %207 = vst [vmem:[%s153 + $0x68] sm:%s145] %v206
                %v208 = vld [vmem:[%s152 + $0xd0] sm:%s145]
                %209 = vst [vmem:[%s153 + $0x6c] sm:%s145] %v208
                %v210 = vld [vmem:[%s152 + $0xd4] sm:%s145]
                %211 = vst [vmem:[%s153 + $0x70] sm:%s145] %v210
                %v212 = vld [vmem:[%s152 + $0xd8] sm:%s145]
                %213 = vst [vmem:[%s153 + $0x74] sm:%s145] %v212
                %v214 = vld [vmem:[%s152 + $0xdc] sm:%s145]
                %215 = vst [vmem:[%s153 + $0x78] sm:%s145] %v214
                %v216 = vld [vmem:[%s152 + $0xe0] sm:%s145]
                %217 = vst [vmem:[%s153 + $0x7c] sm:%s145] %v216
                %v218 = vld [vmem:[%s152 + $0xe4] sm:%s145]
                %219 = vst [vmem:[%s153 + $0x80] sm:%s145] %v218
                %v220 = vld [vmem:[%s152 + $0xe8] sm:%s145]
                %221 = vst [vmem:[%s153 + $0x84] sm:%s145] %v220
                %v222 = vld [vmem:[%s152 + $0xec] sm:%s145]
                %223 = vst [vmem:[%s153 + $0x88] sm:%s145] %v222
                %v224 = vld [vmem:[%s152 + $0xf0] sm:%s145]
                %225 = vst [vmem:[%s153 + $0x8c] sm:%s145] %v224
                %v226 = vld [vmem:[%s152 + $0xf4] sm:%s145]
                %227 = vst [vmem:[%s153 + $0x90] sm:%s145] %v226
                %v228 = vld [vmem:[%s152 + $0xf8] sm:%s145]
                %229 = vst [vmem:[%s153 + $0x94] sm:%s145] %v228
                %v230 = vld [vmem:[%s152 + $0xfc] sm:%s145]
                %231 = vst [vmem:[%s153 + $0x98] sm:%s145] %v230
                %v232 = vld [vmem:[%s152 + $0x100] sm:%s145]
                %233 = vst [vmem:[%s153 + $0x9c] sm:%s145] %v232
                %v234 = vld [vmem:[%s152 + $0x104] sm:%s145]
                %235 = vst [vmem:[%s153 + $0xa0] sm:%s145] %v234
                %v236 = vld [vmem:[%s152 + $0x108] sm:%s145]
                %237 = vst [vmem:[%s153 + $0xa4] sm:%s145] %v236
                %v238 = vld [vmem:[%s152 + $0x10c] sm:%s145]
                %239 = vst [vmem:[%s153 + $0xa8] sm:%s145] %v238
                %v240 = vld [vmem:[%s152 + $0x110] sm:%s145]
                %241 = vst [vmem:[%s153 + $0xac] sm:%s145] %v240
                %v242 = vld [vmem:[%s152 + $0x114] sm:%s145]
                %243 = vst [vmem:[%s153 + $0xb0] sm:%s145] %v242
                %v244 = vld [vmem:[%s152 + $0x118] sm:%s145]
                %245 = vst [vmem:[%s153 + $0xb4] sm:%s145] %v244
                %v246 = vld [vmem:[%s152 + $0x11c] sm:%s145]
                %247 = vst [vmem:[%s153 + $0xb8] sm:%s145] %v246
                %v248 = vld [vmem:[%s152 + $0x120] sm:%s145]
                %249 = vst [vmem:[%s153 + $0xbc] sm:%s145] %v248
                %v250 = vld [vmem:[%s152 + $0x124] sm:%s145]
                %251 = vst [vmem:[%s153 + $0xc0] sm:%s145] %v250
                %v252 = vld [vmem:[%s152 + $0x128] sm:%s145]
                %253 = vst [vmem:[%s153 + $0xc4] sm:%s145] %v252
                %v254 = vld [vmem:[%s152 + $0x190] sm:%s145]
                %255 = vst [vmem:[%s153 + $0xc8] sm:%s145] %v254
                %v256 = vld [vmem:[%s152 + $0x194] sm:%s145]
                %257 = vst [vmem:[%s153 + $0xcc] sm:%s145] %v256
                %v258 = vld [vmem:[%s152 + $0x198] sm:%s145]
                %259 = vst [vmem:[%s153 + $0xd0] sm:%s145] %v258
                %v260 = vld [vmem:[%s152 + $0x19c] sm:%s145]
                %261 = vst [vmem:[%s153 + $0xd4] sm:%s145] %v260
                %v262 = vld [vmem:[%s152 + $0x1a0] sm:%s145]
                %263 = vst [vmem:[%s153 + $0xd8] sm:%s145] %v262
                %v264 = vld [vmem:[%s152 + $0x1a4] sm:%s145]
                %265 = vst [vmem:[%s153 + $0xdc] sm:%s145] %v264
                %v266 = vld [vmem:[%s152 + $0x1a8] sm:%s145]
                %267 = vst [vmem:[%s153 + $0xe0] sm:%s145] %v266
                %v268 = vld [vmem:[%s152 + $0x1ac] sm:%s145]
                %269 = vst [vmem:[%s153 + $0xe4] sm:%s145] %v268
                %v270 = vld [vmem:[%s152 + $0x1b0] sm:%s145]
                %271 = vst [vmem:[%s153 + $0xe8] sm:%s145] %v270
                %v272 = vld [vmem:[%s152 + $0x1b4] sm:%s145]
                %273 = vst [vmem:[%s153 + $0xec] sm:%s145] %v272
                %v274 = vld [vmem:[%s152 + $0x1b8] sm:%s145]
                %275 = vst [vmem:[%s153 + $0xf0] sm:%s145] %v274
                %v276 = vld [vmem:[%s152 + $0x1bc] sm:%s145]
                %277 = vst [vmem:[%s153 + $0xf4] sm:%s145] %v276
                %v278 = vld [vmem:[%s152 + $0x1c0] sm:%s145]
                %279 = vst [vmem:[%s153 + $0xf8] sm:%s145] %v278
                %v280 = vld [vmem:[%s152 + $0x1c4] sm:%s145]
                %281 = vst [vmem:[%s153 + $0xfc] sm:%s145] %v280
                %v282 = vld [vmem:[%s152 + $0x1c8] sm:%s145]
                %283 = vst [vmem:[%s153 + $0x100] sm:%s145] %v282
                %v284 = vld [vmem:[%s152 + $0x1cc] sm:%s145]
                %285 = vst [vmem:[%s153 + $0x104] sm:%s145] %v284
                %v286 = vld [vmem:[%s152 + $0x1d0] sm:%s145]
                %287 = vst [vmem:[%s153 + $0x108] sm:%s145] %v286
                %v288 = vld [vmem:[%s152 + $0x1d4] sm:%s145]
                %289 = vst [vmem:[%s153 + $0x10c] sm:%s145] %v288
                %v290 = vld [vmem:[%s152 + $0x1d8] sm:%s145]
                %291 = vst [vmem:[%s153 + $0x110] sm:%s145] %v290
                %v292 = vld [vmem:[%s152 + $0x1dc] sm:%s145]
                %293 = vst [vmem:[%s153 + $0x114] sm:%s145] %v292
                %v294 = vld [vmem:[%s152 + $0x1e0] sm:%s145]
                %295 = vst [vmem:[%s153 + $0x118] sm:%s145] %v294
                %v296 = vld [vmem:[%s152 + $0x1e4] sm:%s145]
                %297 = vst [vmem:[%s153 + $0x11c] sm:%s145] %v296
                %v298 = vld [vmem:[%s152 + $0x1e8] sm:%s145]
                %299 = vst [vmem:[%s153 + $0x120] sm:%s145] %v298
                %v300 = vld [vmem:[%s152 + $0x1ec] sm:%s145]
                %301 = vst [vmem:[%s153 + $0x124] sm:%s145] %v300
                %v302 = vld [vmem:[%s152 + $0x1f0] sm:%s145]
                %303 = vst [vmem:[%s153 + $0x128] sm:%s145] %v302
                %v304 = vld [vmem:[%s152 + $0x258] sm:%s145]
                %305 = vst [vmem:[%s153 + $0x12c] sm:%s145] %v304
                %v306 = vld [vmem:[%s152 + $0x25c] sm:%s145]
                %307 = vst [vmem:[%s153 + $0x130] sm:%s145] %v306
                %v308 = vld [vmem:[%s152 + $0x260] sm:%s145]
                %309 = vst [vmem:[%s153 + $0x134] sm:%s145] %v308
                %v310 = vld [vmem:[%s152 + $0x264] sm:%s145]
                %311 = vst [vmem:[%s153 + $0x138] sm:%s145] %v310
                %v312 = vld [vmem:[%s152 + $0x268] sm:%s145]
                %313 = vst [vmem:[%s153 + $0x13c] sm:%s145] %v312
                %v314 = vld [vmem:[%s152 + $0x26c] sm:%s145]
                %315 = vst [vmem:[%s153 + $0x140] sm:%s145] %v314
                %v316 = vld [vmem:[%s152 + $0x270] sm:%s145]
                %317 = vst [vmem:[%s153 + $0x144] sm:%s145] %v316
                %v318 = vld [vmem:[%s152 + $0x274] sm:%s145]
                %319 = vst [vmem:[%s153 + $0x148] sm:%s145] %v318
                %v320 = vld [vmem:[%s152 + $0x278] sm:%s145]
                %321 = vst [vmem:[%s153 + $0x14c] sm:%s145] %v320
                %v322 = vld [vmem:[%s152 + $0x27c] sm:%s145]
                %323 = vst [vmem:[%s153 + $0x150] sm:%s145] %v322
                %v324 = vld [vmem:[%s152 + $0x280] sm:%s145]
                %325 = vst [vmem:[%s153 + $0x154] sm:%s145] %v324
                %v326 = vld [vmem:[%s152 + $0x284] sm:%s145]
                %327 = vst [vmem:[%s153 + $0x158] sm:%s145] %v326
                %v328 = vld [vmem:[%s152 + $0x288] sm:%s145]
                %329 = vst [vmem:[%s153 + $0x15c] sm:%s145] %v328
                %v330 = vld [vmem:[%s152 + $0x28c] sm:%s145]
                %331 = vst [vmem:[%s153 + $0x160] sm:%s145] %v330
                %v332 = vld [vmem:[%s152 + $0x290] sm:%s145]
                %333 = vst [vmem:[%s153 + $0x164] sm:%s145] %v332
                %v334 = vld [vmem:[%s152 + $0x294] sm:%s145]
                %335 = vst [vmem:[%s153 + $0x168] sm:%s145] %v334
                %v336 = vld [vmem:[%s152 + $0x298] sm:%s145]
                %337 = vst [vmem:[%s153 + $0x16c] sm:%s145] %v336
                %v338 = vld [vmem:[%s152 + $0x29c] sm:%s145]
                %339 = vst [vmem:[%s153 + $0x170] sm:%s145] %v338
                %v340 = vld [vmem:[%s152 + $0x2a0] sm:%s145]
                %341 = vst [vmem:[%s153 + $0x174] sm:%s145] %v340
                %v342 = vld [vmem:[%s152 + $0x2a4] sm:%s145]
                %343 = vst [vmem:[%s153 + $0x178] sm:%s145] %v342
                %v344 = vld [vmem:[%s152 + $0x2a8] sm:%s145]
                %345 = vst [vmem:[%s153 + $0x17c] sm:%s145] %v344
                %v346 = vld [vmem:[%s152 + $0x2ac] sm:%s145]
                %347 = vst [vmem:[%s153 + $0x180] sm:%s145] %v346
                %v348 = vld [vmem:[%s152 + $0x2b0] sm:%s145]
                %349 = vst [vmem:[%s153 + $0x184] sm:%s145] %v348
                %v350 = vld [vmem:[%s152 + $0x2b4] sm:%s145]
                %351 = vst [vmem:[%s153 + $0x188] sm:%s145] %v350
                %v352 = vld [vmem:[%s152 + $0x2b8] sm:%s145]
                %353 = vst [vmem:[%s153 + $0x18c] sm:%s145] %v352
              $region45: #{lenet5_forward.3} parent=39 // loop_footer
                %s151 = sadd.s32 1, %s147
              $region46: #{lenet5_forward.3} parent=39 // loop_footer_branch
                %146 = sbr.rel target = $region42
              $region47: #{lenet5_forward.3} parent=39 // loop_exit
                _
            $region40: #{lenet5_forward.3} parent=31 // pred_fallthru
              _
          $region32: #{lenet5_forward.3} parent=27 // pred_fallthru
            _
          %574 = vnop
        $region28: #{lenet5_forward.3} parent=23 // pred_fallthru
          _
      $region24: #{lenet5_forward.3} parent=5 // pred_fallthru
        _
      %p575 = scmp.le.s32.totalorder 1, %s9
      %p576 = scmp.lt.s32.totalorder %s9, 3
      %p577 = pnand %p575, %p576
      %p578 = pneg %p577
      // Predicated region
      $region66: #{lenet5_forward.3} parent=5 // pred_check
        _
      $region67: #{lenet5_forward.3} parent=5 // pred_check_branch
        %580 = sbr.rel (%p577) target = $region69
      $region68: #{lenet5_forward.3} parent=5 // pred_region
        %s581 = ssub.s32 %s9, 1
        %s582 = sand.u32 %s22, 1
        %s583 = sand.u32 %s22, 1
        %s584 = smul.addr %s583, 400
        %s585 = scalar_lea.vmem [#allocation2], %s584
        // Predicated region
        $region70: #{lenet5_forward.3} parent=68 // pred_check
          %p586 = pneg %p35
        $region71: #{lenet5_forward.3} parent=68 // pred_check_branch
          %588 = sbr.rel (%p586) target = $region73
        $region72: #{lenet5_forward.3} parent=68 // pred_region
          _
        $region73: #{lenet5_forward.3} parent=68 // pred_fallthru
          _
        %s589 = sand.u32 %s22, 1
        %s590 = sand.u32 %s22, 1
        %s591 = smul.addr %s590, 400
        %s592 = scalar_lea.vmem [#allocation2], %s591
        %p593 = pneg %p35
        %p594 = pneg %p32
        %p595 = pneg %p56
        %p596 = pneg %p53
        %p597 = pneg %p77
        %p598 = pneg %p74
        %p599 = pneg %p103
        %p600 = pneg %p100
        %s601 = smul.u32 25, %s14
        %p602 = scmp.lt.s32.totalorder %s601, 49
        %s603 = scalar_select %p602, %s601, 49
        %s604 = smul.addr %s603, 8
        %s605 = scalar_lea.vmem %s3, %s604
        %s606 = smul.u32 25, %s14
        %s607 = smul.u32 25, %s14
        %p608 = scmp.lt.s32.totalorder %s607, 49
        %s609 = scalar_select %p608, %s607, 49
        %s610 = smul.addr %s609, 8
        %s611 = scalar_lea.vmem %s3, %s610
        %s612 = smul.u32 25, %s14
        %v613 = vld [vmem:[%s1] sm:$0xf]
        %v614 = vld [vmem:[%s1 + $0x4] sm:$0xf]
        %v615 = vld [vmem:[%s1 + $0x8] sm:$0xf]
        %v616 = vld [vmem:[%s1 + $0xc] sm:$0xf]
        %v617 = vld [vmem:[%s1 + $0x10] sm:$0xf]
        %v618 = vld [vmem:[%s1 + $0x14] sm:$0xf]
        %v619 = vld [vmem:[%s1 + $0x18] sm:$0xf]
        %v620 = vld [vmem:[%s1 + $0x1c] sm:$0xf]
        %v621 = vld [vmem:[%s1 + $0x20] sm:$0xf]
        %v622 = vld [vmem:[%s1 + $0x24] sm:$0xf]
        %v623 = vld [vmem:[%s1 + $0x28] sm:$0xf]
        %v624 = vld [vmem:[%s1 + $0x2c] sm:$0xf]
        %v625 = vld [vmem:[%s1 + $0x30] sm:$0xf]
        %v626 = vld [vmem:[%s1 + $0x34] sm:$0xf]
        %v627 = vld [vmem:[%s1 + $0x38] sm:$0xf]
        %v628 = vld [vmem:[%s1 + $0x3c] sm:$0xf]
        %v629 = vld [vmem:[%s585] sm:$0xf]
        %v630 = vld [vmem:[%s585 + $0x4] sm:$0xf]
        %v631 = vld [vmem:[%s585 + $0x8] sm:$0xf]
        %v632 = vld [vmem:[%s585 + $0xc] sm:$0xf]
        %v633 = vld [vmem:[%s585 + $0x10] sm:$0xf]
        %v634 = vld [vmem:[%s585 + $0x14] sm:$0xf]
        %v635 = vld [vmem:[%s585 + $0x18] sm:$0xf]
        %v636 = vld [vmem:[%s585 + $0x1c] sm:$0xf]
        %v637 = vld [vmem:[%s585 + $0x20] sm:$0xf]
        %v638 = vld [vmem:[%s585 + $0x24] sm:$0xf]
        %v639 = vld [vmem:[%s585 + $0x28] sm:$0xf]
        %v640 = vld [vmem:[%s585 + $0x2c] sm:$0xf]
        %v641 = vld [vmem:[%s585 + $0x30] sm:$0xf]
        %v642 = vld [vmem:[%s585 + $0x34] sm:$0xf]
        %v643 = vld [vmem:[%s585 + $0x38] sm:$0xf]
        %v644 = vld [vmem:[%s585 + $0x3c] sm:$0xf]
        %v645 = vld [vmem:[%s585 + $0x40] sm:$0xf]
        %v646 = vld [vmem:[%s585 + $0x44] sm:$0xf]
        %v647 = vld [vmem:[%s585 + $0x48] sm:$0xf]
        %v648 = vld [vmem:[%s585 + $0x4c] sm:$0xf]
        %v649 = vld [vmem:[%s585 + $0x50] sm:$0xf]
        %v650 = vld [vmem:[%s585 + $0x54] sm:$0xf]
        %v651 = vld [vmem:[%s585 + $0x58] sm:$0xf]
        %v652 = vld [vmem:[%s585 + $0x5c] sm:$0xf]
        %v653 = vld [vmem:[%s585 + $0x60] sm:$0xf]
        %v679 = vunpack.c.l.b16 %v629
        %v680 = vunpack.c.l.b16 %v630
        %v681 = vunpack.c.l.b16 %v631
        %v682 = vunpack.c.l.b16 %v632
        %v683 = vunpack.c.l.b16 %v633
        %v684 = vunpack.c.l.b16 %v634
        %v685 = vunpack.c.l.b16 %v635
        %v686 = vunpack.c.l.b16 %v636
        %v687 = vunpack.c.l.b16 %v637
        %v688 = vunpack.c.l.b16 %v638
        %v689 = vunpack.c.l.b16 %v639
        %v690 = vunpack.c.l.b16 %v640
        %v691 = vunpack.c.l.b16 %v641
        %v692 = vunpack.c.l.b16 %v642
        %v693 = vunpack.c.l.b16 %v643
        %v694 = vunpack.c.l.b16 %v644
        %v695 = vunpack.c.l.b16 %v645
        %v696 = vunpack.c.l.b16 %v646
        %v697 = vunpack.c.l.b16 %v647
        %v698 = vunpack.c.l.b16 %v648
        %v699 = vunpack.c.l.b16 %v649
        %v700 = vunpack.c.l.b16 %v650
        %v701 = vunpack.c.l.b16 %v651
        %v702 = vunpack.c.l.b16 %v652
        %v703 = vunpack.c.l.b16 %v653
        %v704 = vpack.c.b16 %v680, %v679
        %v705 = vpack.c.b16 %v682, %v681
        %v706 = vpack.c.b16 %v684, %v683
        %v707 = vpack.c.b16 %v686, %v685
        %v708 = vpack.c.b16 %v688, %v687
        %v709 = vpack.c.b16 %v690, %v689
        %v710 = vpack.c.b16 %v692, %v691
        %v711 = vpack.c.b16 %v694, %v693
        %v712 = vpack.c.b16 %v696, %v695
        %v713 = vpack.c.b16 %v698, %v697
        %v714 = vpack.c.b16 %v700, %v699
        %v715 = vpack.c.b16 %v702, %v701
        %v716 = vpack.c.b16 %v703, %v703
        %v746 = vunpack.c.l.b16 %v613
        %v747 = vunpack.c.l.b16 %v614
        %v748 = vunpack.c.l.b16 %v615
        %v749 = vunpack.c.l.b16 %v616
        %v750 = vunpack.c.l.b16 %v617
        %v751 = vunpack.c.l.b16 %v618
        %v752 = vunpack.c.l.b16 %v619
        %v753 = vunpack.c.l.b16 %v620
        %v754 = vunpack.c.l.b16 %v621
        %v755 = vunpack.c.l.b16 %v622
        %v756 = vunpack.c.l.b16 %v623
        %v757 = vunpack.c.l.b16 %v624
        %v758 = vunpack.c.l.b16 %v625
        %v759 = vunpack.c.l.b16 %v626
        %v760 = vunpack.c.l.b16 %v627
        %v761 = vunpack.c.l.b16 %v628
        %v762 = vpack.c.b16 %v747, %v746
        %v763 = vpack.c.b16 %v749, %v748
        %v764 = vpack.c.b16 %v751, %v750
        %v765 = vpack.c.b16 %v753, %v752
        %v766 = vpack.c.b16 %v755, %v754
        %v767 = vpack.c.b16 %v757, %v756
        %v768 = vpack.c.b16 %v759, %v758
        %v769 = vpack.c.b16 %v761, %v760
        %778 = vmatpush.bf16.msra.mxu0 %v769
        %779 = vmatpush.bf16.msra.mxu0 %v768
        %780 = vmatpush.bf16.msra.mxu0 %v767
        %781 = vmatpush.bf16.msra.mxu0 %v766
        %782 = vmatpush.bf16.msra.mxu0 %v765
        %783 = vmatpush.bf16.msra.mxu0 %v764
        %784 = vmatpush.bf16.msra.mxu0 %v763
        %785 = vmatpush.bf16.msra.mxu0 %v762
        %786 = vmatmul.bf16.gmra.mxu0 %v704
        %v787 = vpop.f32.mrf.mxu0
        %v788 = vadd.f32 0.0, %v787
        %v789 = vpop.f32.mrf.mxu0
        %v790 = vadd.f32 0.0, %v789
        %791 = vmatmul.bf16.gmra.mxu0 %v705
        %v792 = vpop.f32.mrf.mxu0
        %v793 = vadd.f32 0.0, %v792
        %v794 = vpop.f32.mrf.mxu0
        %v795 = vadd.f32 0.0, %v794
        %796 = vmatmul.bf16.gmra.mxu0 %v706
        %v797 = vpop.f32.mrf.mxu0
        %v798 = vadd.f32 0.0, %v797
        %v799 = vpop.f32.mrf.mxu0
        %v800 = vadd.f32 0.0, %v799
        %801 = vmatmul.bf16.gmra.mxu0 %v707
        %v802 = vpop.f32.mrf.mxu0
        %v803 = vadd.f32 0.0, %v802
        %v804 = vpop.f32.mrf.mxu0
        %v805 = vadd.f32 0.0, %v804
        %806 = vmatmul.bf16.gmra.mxu0 %v708
        %v807 = vpop.f32.mrf.mxu0
        %v808 = vadd.f32 0.0, %v807
        %v809 = vpop.f32.mrf.mxu0
        %v810 = vadd.f32 0.0, %v809
        %811 = vmatmul.bf16.gmra.mxu0 %v709
        %v812 = vpop.f32.mrf.mxu0
        %v813 = vadd.f32 0.0, %v812
        %v814 = vpop.f32.mrf.mxu0
        %v815 = vadd.f32 0.0, %v814
        %816 = vmatmul.bf16.gmra.mxu0 %v710
        %v817 = vpop.f32.mrf.mxu0
        %v818 = vadd.f32 0.0, %v817
        %v819 = vpop.f32.mrf.mxu0
        %v820 = vadd.f32 0.0, %v819
        %821 = vmatmul.bf16.gmra.mxu0 %v711
        %v822 = vpop.f32.mrf.mxu0
        %v823 = vadd.f32 0.0, %v822
        %v824 = vpop.f32.mrf.mxu0
        %v825 = vadd.f32 0.0, %v824
        %826 = vmatmul.bf16.gmra.mxu0 %v712
        %v827 = vpop.f32.mrf.mxu0
        %v828 = vadd.f32 0.0, %v827
        %v829 = vpop.f32.mrf.mxu0
        %v830 = vadd.f32 0.0, %v829
        %831 = vmatmul.bf16.gmra.mxu0 %v713
        %v832 = vpop.f32.mrf.mxu0
        %v833 = vadd.f32 0.0, %v832
        %v834 = vpop.f32.mrf.mxu0
        %v835 = vadd.f32 0.0, %v834
        %836 = vmatmul.bf16.gmra.mxu0 %v714
        %v837 = vpop.f32.mrf.mxu0
        %v838 = vadd.f32 0.0, %v837
        %v839 = vpop.f32.mrf.mxu0
        %v840 = vadd.f32 0.0, %v839
        %841 = vmatmul.bf16.gmra.mxu0 %v715
        %v842 = vpop.f32.mrf.mxu0
        %v843 = vadd.f32 0.0, %v842
        %v844 = vpop.f32.mrf.mxu0
        %v845 = vadd.f32 0.0, %v844
        %846 = vmatmul.bf16.gmra.mxu0 %v716
        %v847 = vpop.f32.mrf.mxu0
        %v848 = vadd.f32 0.0, %v847
        %v849 = vpop.f32.mrf.mxu0
        %850 = vdwg.mxu0
        %s851 = scalar_lea.vmem %s585, 100 [#allocation2]
        %v852 = vld [vmem:[%s851] sm:$0xf]
        %v853 = vld [vmem:[%s851 + $0x4] sm:$0xf]
        %v854 = vld [vmem:[%s851 + $0x8] sm:$0xf]
        %v855 = vld [vmem:[%s851 + $0xc] sm:$0xf]
        %v856 = vld [vmem:[%s851 + $0x10] sm:$0xf]
        %v857 = vld [vmem:[%s851 + $0x14] sm:$0xf]
        %v858 = vld [vmem:[%s851 + $0x18] sm:$0xf]
        %v859 = vld [vmem:[%s851 + $0x1c] sm:$0xf]
        %v860 = vld [vmem:[%s851 + $0x20] sm:$0xf]
        %v861 = vld [vmem:[%s851 + $0x24] sm:$0xf]
        %v862 = vld [vmem:[%s851 + $0x28] sm:$0xf]
        %v863 = vld [vmem:[%s851 + $0x2c] sm:$0xf]
        %v864 = vld [vmem:[%s851 + $0x30] sm:$0xf]
        %v865 = vld [vmem:[%s851 + $0x34] sm:$0xf]
        %v866 = vld [vmem:[%s851 + $0x38] sm:$0xf]
        %v867 = vld [vmem:[%s851 + $0x3c] sm:$0xf]
        %v868 = vld [vmem:[%s851 + $0x40] sm:$0xf]
        %v869 = vld [vmem:[%s851 + $0x44] sm:$0xf]
        %v870 = vld [vmem:[%s851 + $0x48] sm:$0xf]
        %v871 = vld [vmem:[%s851 + $0x4c] sm:$0xf]
        %v872 = vld [vmem:[%s851 + $0x50] sm:$0xf]
        %v873 = vld [vmem:[%s851 + $0x54] sm:$0xf]
        %v874 = vld [vmem:[%s851 + $0x58] sm:$0xf]
        %v875 = vld [vmem:[%s851 + $0x5c] sm:$0xf]
        %v876 = vld [vmem:[%s851 + $0x60] sm:$0xf]
        %v902 = vunpack.c.l.b16 %v852
        %v903 = vunpack.c.l.b16 %v853
        %v904 = vunpack.c.l.b16 %v854
        %v905 = vunpack.c.l.b16 %v855
        %v906 = vunpack.c.l.b16 %v856
        %v907 = vunpack.c.l.b16 %v857
        %v908 = vunpack.c.l.b16 %v858
        %v909 = vunpack.c.l.b16 %v859
        %v910 = vunpack.c.l.b16 %v860
        %v911 = vunpack.c.l.b16 %v861
        %v912 = vunpack.c.l.b16 %v862
        %v913 = vunpack.c.l.b16 %v863
        %v914 = vunpack.c.l.b16 %v864
        %v915 = vunpack.c.l.b16 %v865
        %v916 = vunpack.c.l.b16 %v866
        %v917 = vunpack.c.l.b16 %v867
        %v918 = vunpack.c.l.b16 %v868
        %v919 = vunpack.c.l.b16 %v869
        %v920 = vunpack.c.l.b16 %v870
        %v921 = vunpack.c.l.b16 %v871
        %v922 = vunpack.c.l.b16 %v872
        %v923 = vunpack.c.l.b16 %v873
        %v924 = vunpack.c.l.b16 %v874
        %v925 = vunpack.c.l.b16 %v875
        %v926 = vunpack.c.l.b16 %v876
        %v927 = vpack.c.b16 %v903, %v902
        %v928 = vpack.c.b16 %v905, %v904
        %v929 = vpack.c.b16 %v907, %v906
        %v930 = vpack.c.b16 %v909, %v908
        %v931 = vpack.c.b16 %v911, %v910
        %v932 = vpack.c.b16 %v913, %v912
        %v933 = vpack.c.b16 %v915, %v914
        %v934 = vpack.c.b16 %v917, %v916
        %v935 = vpack.c.b16 %v919, %v918
        %v936 = vpack.c.b16 %v921, %v920
        %v937 = vpack.c.b16 %v923, %v922
        %v938 = vpack.c.b16 %v925, %v924
        %v939 = vpack.c.b16 %v926, %v926
        %953 = vmatpush.bf16.msra.mxu0 %v769
        %954 = vmatpush.bf16.msra.mxu0 %v768
        %955 = vmatpush.bf16.msra.mxu0 %v767
        %956 = vmatpush.bf16.msra.mxu0 %v766
        %957 = vmatpush.bf16.msra.mxu0 %v765
        %958 = vmatpush.bf16.msra.mxu0 %v764
        %959 = vmatpush.bf16.msra.mxu0 %v763
        %960 = vmatpush.bf16.msra.mxu0 %v762
        %961 = vmatmul.bf16.gmra.mxu0 %v927
        %v962 = vpop.f32.mrf.mxu0
        %v963 = vadd.f32 0.0, %v962
        %v964 = vpop.f32.mrf.mxu0
        %v965 = vadd.f32 0.0, %v964
        %966 = vmatmul.bf16.gmra.mxu0 %v928
        %v967 = vpop.f32.mrf.mxu0
        %v968 = vadd.f32 0.0, %v967
        %v969 = vpop.f32.mrf.mxu0
        %v970 = vadd.f32 0.0, %v969
        %971 = vmatmul.bf16.gmra.mxu0 %v929
        %v972 = vpop.f32.mrf.mxu0
        %v973 = vadd.f32 0.0, %v972
        %v974 = vpop.f32.mrf.mxu0
        %v975 = vadd.f32 0.0, %v974
        %976 = vmatmul.bf16.gmra.mxu0 %v930
        %v977 = vpop.f32.mrf.mxu0
        %v978 = vadd.f32 0.0, %v977
        %v979 = vpop.f32.mrf.mxu0
        %v980 = vadd.f32 0.0, %v979
        %981 = vmatmul.bf16.gmra.mxu0 %v931
        %v982 = vpop.f32.mrf.mxu0
        %v983 = vadd.f32 0.0, %v982
        %v984 = vpop.f32.mrf.mxu0
        %v985 = vadd.f32 0.0, %v984
        %986 = vmatmul.bf16.gmra.mxu0 %v932
        %v987 = vpop.f32.mrf.mxu0
        %v988 = vadd.f32 0.0, %v987
        %v989 = vpop.f32.mrf.mxu0
        %v990 = vadd.f32 0.0, %v989
        %991 = vmatmul.bf16.gmra.mxu0 %v933
        %v992 = vpop.f32.mrf.mxu0
        %v993 = vadd.f32 0.0, %v992
        %v994 = vpop.f32.mrf.mxu0
        %v995 = vadd.f32 0.0, %v994
        %996 = vmatmul.bf16.gmra.mxu0 %v934
        %v997 = vpop.f32.mrf.mxu0
        %v998 = vadd.f32 0.0, %v997
        %v999 = vpop.f32.mrf.mxu0
        %v1000 = vadd.f32 0.0, %v999
        %1001 = vmatmul.bf16.gmra.mxu0 %v935
        %v1002 = vpop.f32.mrf.mxu0
        %v1003 = vadd.f32 0.0, %v1002
        %v1004 = vpop.f32.mrf.mxu0
        %v1005 = vadd.f32 0.0, %v1004
        %1006 = vmatmul.bf16.gmra.mxu0 %v936
        %v1007 = vpop.f32.mrf.mxu0
        %v1008 = vadd.f32 0.0, %v1007
        %v1009 = vpop.f32.mrf.mxu0
        %v1010 = vadd.f32 0.0, %v1009
        %1011 = vmatmul.bf16.gmra.mxu0 %v937
        %v1012 = vpop.f32.mrf.mxu0
        %v1013 = vadd.f32 0.0, %v1012
        %v1014 = vpop.f32.mrf.mxu0
        %v1015 = vadd.f32 0.0, %v1014
        %1016 = vmatmul.bf16.gmra.mxu0 %v938
        %v1017 = vpop.f32.mrf.mxu0
        %v1018 = vadd.f32 0.0, %v1017
        %v1019 = vpop.f32.mrf.mxu0
        %v1020 = vadd.f32 0.0, %v1019
        %1021 = vmatmul.bf16.gmra.mxu0 %v939
        %v1022 = vpop.f32.mrf.mxu0
        %v1023 = vadd.f32 0.0, %v1022
        %v1024 = vpop.f32.mrf.mxu0
        %1025 = vdwg.mxu0
        %v1026 = vmax.f32 %v788, %v963
        %v1027 = vmax.f32 %v790, %v965
        %v1028 = vmax.f32 %v793, %v968
        %v1029 = vmax.f32 %v795, %v970
        %v1030 = vmax.f32 %v798, %v973
        %v1031 = vmax.f32 %v800, %v975
        %v1032 = vmax.f32 %v803, %v978
        %v1033 = vmax.f32 %v805, %v980
        %v1034 = vmax.f32 %v808, %v983
        %v1035 = vmax.f32 %v810, %v985
        %v1036 = vmax.f32 %v813, %v988
        %v1037 = vmax.f32 %v815, %v990
        %v1038 = vmax.f32 %v818, %v993
        %v1039 = vmax.f32 %v820, %v995
        %v1040 = vmax.f32 %v823, %v998
        %v1041 = vmax.f32 %v825, %v1000
        %v1042 = vmax.f32 %v828, %v1003
        %v1043 = vmax.f32 %v830, %v1005
        %v1044 = vmax.f32 %v833, %v1008
        %v1045 = vmax.f32 %v835, %v1010
        %v1046 = vmax.f32 %v838, %v1013
        %v1047 = vmax.f32 %v840, %v1015
        %v1048 = vmax.f32 %v843, %v1018
        %v1049 = vmax.f32 %v845, %v1020
        %v1050 = vmax.f32 %v848, %v1023
        %s1051 = scalar_lea.vmem %s585, 200 [#allocation2]
        %v1052 = vld [vmem:[%s1051] sm:$0xf]
        %v1053 = vld [vmem:[%s1051 + $0x4] sm:$0xf]
        %v1054 = vld [vmem:[%s1051 + $0x8] sm:$0xf]
        %v1055 = vld [vmem:[%s1051 + $0xc] sm:$0xf]
        %v1056 = vld [vmem:[%s1051 + $0x10] sm:$0xf]
        %v1057 = vld [vmem:[%s1051 + $0x14] sm:$0xf]
        %v1058 = vld [vmem:[%s1051 + $0x18] sm:$0xf]
        %v1059 = vld [vmem:[%s1051 + $0x1c] sm:$0xf]
        %v1060 = vld [vmem:[%s1051 + $0x20] sm:$0xf]
        %v1061 = vld [vmem:[%s1051 + $0x24] sm:$0xf]
        %v1062 = vld [vmem:[%s1051 + $0x28] sm:$0xf]
        %v1063 = vld [vmem:[%s1051 + $0x2c] sm:$0xf]
        %v1064 = vld [vmem:[%s1051 + $0x30] sm:$0xf]
        %v1065 = vld [vmem:[%s1051 + $0x34] sm:$0xf]
        %v1066 = vld [vmem:[%s1051 + $0x38] sm:$0xf]
        %v1067 = vld [vmem:[%s1051 + $0x3c] sm:$0xf]
        %v1068 = vld [vmem:[%s1051 + $0x40] sm:$0xf]
        %v1069 = vld [vmem:[%s1051 + $0x44] sm:$0xf]
        %v1070 = vld [vmem:[%s1051 + $0x48] sm:$0xf]
        %v1071 = vld [vmem:[%s1051 + $0x4c] sm:$0xf]
        %v1072 = vld [vmem:[%s1051 + $0x50] sm:$0xf]
        %v1073 = vld [vmem:[%s1051 + $0x54] sm:$0xf]
        %v1074 = vld [vmem:[%s1051 + $0x58] sm:$0xf]
        %v1075 = vld [vmem:[%s1051 + $0x5c] sm:$0xf]
        %v1076 = vld [vmem:[%s1051 + $0x60] sm:$0xf]
        %v1102 = vunpack.c.l.b16 %v1052
        %v1103 = vunpack.c.l.b16 %v1053
        %v1104 = vunpack.c.l.b16 %v1054
        %v1105 = vunpack.c.l.b16 %v1055
        %v1106 = vunpack.c.l.b16 %v1056
        %v1107 = vunpack.c.l.b16 %v1057
        %v1108 = vunpack.c.l.b16 %v1058
        %v1109 = vunpack.c.l.b16 %v1059
        %v1110 = vunpack.c.l.b16 %v1060
        %v1111 = vunpack.c.l.b16 %v1061
        %v1112 = vunpack.c.l.b16 %v1062
        %v1113 = vunpack.c.l.b16 %v1063
        %v1114 = vunpack.c.l.b16 %v1064
        %v1115 = vunpack.c.l.b16 %v1065
        %v1116 = vunpack.c.l.b16 %v1066
        %v1117 = vunpack.c.l.b16 %v1067
        %v1118 = vunpack.c.l.b16 %v1068
        %v1119 = vunpack.c.l.b16 %v1069
        %v1120 = vunpack.c.l.b16 %v1070
        %v1121 = vunpack.c.l.b16 %v1071
        %v1122 = vunpack.c.l.b16 %v1072
        %v1123 = vunpack.c.l.b16 %v1073
        %v1124 = vunpack.c.l.b16 %v1074
        %v1125 = vunpack.c.l.b16 %v1075
        %v1126 = vunpack.c.l.b16 %v1076
        %v1127 = vpack.c.b16 %v1103, %v1102
        %v1128 = vpack.c.b16 %v1105, %v1104
        %v1129 = vpack.c.b16 %v1107, %v1106
        %v1130 = vpack.c.b16 %v1109, %v1108
        %v1131 = vpack.c.b16 %v1111, %v1110
        %v1132 = vpack.c.b16 %v1113, %v1112
        %v1133 = vpack.c.b16 %v1115, %v1114
        %v1134 = vpack.c.b16 %v1117, %v1116
        %v1135 = vpack.c.b16 %v1119, %v1118
        %v1136 = vpack.c.b16 %v1121, %v1120
        %v1137 = vpack.c.b16 %v1123, %v1122
        %v1138 = vpack.c.b16 %v1125, %v1124
        %v1139 = vpack.c.b16 %v1126, %v1126
        %1153 = vmatpush.bf16.msra.mxu0 %v769
        %1154 = vmatpush.bf16.msra.mxu0 %v768
        %1155 = vmatpush.bf16.msra.mxu0 %v767
        %1156 = vmatpush.bf16.msra.mxu0 %v766
        %1157 = vmatpush.bf16.msra.mxu0 %v765
        %1158 = vmatpush.bf16.msra.mxu0 %v764
        %1159 = vmatpush.bf16.msra.mxu0 %v763
        %1160 = vmatpush.bf16.msra.mxu0 %v762
        %1161 = vmatmul.bf16.gmra.mxu0 %v1127
        %v1162 = vpop.f32.mrf.mxu0
        %v1163 = vadd.f32 0.0, %v1162
        %v1164 = vpop.f32.mrf.mxu0
        %v1165 = vadd.f32 0.0, %v1164
        %1166 = vmatmul.bf16.gmra.mxu0 %v1128
        %v1167 = vpop.f32.mrf.mxu0
        %v1168 = vadd.f32 0.0, %v1167
        %v1169 = vpop.f32.mrf.mxu0
        %v1170 = vadd.f32 0.0, %v1169
        %1171 = vmatmul.bf16.gmra.mxu0 %v1129
        %v1172 = vpop.f32.mrf.mxu0
        %v1173 = vadd.f32 0.0, %v1172
        %v1174 = vpop.f32.mrf.mxu0
        %v1175 = vadd.f32 0.0, %v1174
        %1176 = vmatmul.bf16.gmra.mxu0 %v1130
        %v1177 = vpop.f32.mrf.mxu0
        %v1178 = vadd.f32 0.0, %v1177
        %v1179 = vpop.f32.mrf.mxu0
        %v1180 = vadd.f32 0.0, %v1179
        %1181 = vmatmul.bf16.gmra.mxu0 %v1131
        %v1182 = vpop.f32.mrf.mxu0
        %v1183 = vadd.f32 0.0, %v1182
        %v1184 = vpop.f32.mrf.mxu0
        %v1185 = vadd.f32 0.0, %v1184
        %1186 = vmatmul.bf16.gmra.mxu0 %v1132
        %v1187 = vpop.f32.mrf.mxu0
        %v1188 = vadd.f32 0.0, %v1187
        %v1189 = vpop.f32.mrf.mxu0
        %v1190 = vadd.f32 0.0, %v1189
        %1191 = vmatmul.bf16.gmra.mxu0 %v1133
        %v1192 = vpop.f32.mrf.mxu0
        %v1193 = vadd.f32 0.0, %v1192
        %v1194 = vpop.f32.mrf.mxu0
        %v1195 = vadd.f32 0.0, %v1194
        %1196 = vmatmul.bf16.gmra.mxu0 %v1134
        %v1197 = vpop.f32.mrf.mxu0
        %v1198 = vadd.f32 0.0, %v1197
        %v1199 = vpop.f32.mrf.mxu0
        %v1200 = vadd.f32 0.0, %v1199
        %1201 = vmatmul.bf16.gmra.mxu0 %v1135
        %v1202 = vpop.f32.mrf.mxu0
        %v1203 = vadd.f32 0.0, %v1202
        %v1204 = vpop.f32.mrf.mxu0
        %v1205 = vadd.f32 0.0, %v1204
        %1206 = vmatmul.bf16.gmra.mxu0 %v1136
        %v1207 = vpop.f32.mrf.mxu0
        %v1208 = vadd.f32 0.0, %v1207
        %v1209 = vpop.f32.mrf.mxu0
        %v1210 = vadd.f32 0.0, %v1209
        %1211 = vmatmul.bf16.gmra.mxu0 %v1137
        %v1212 = vpop.f32.mrf.mxu0
        %v1213 = vadd.f32 0.0, %v1212
        %v1214 = vpop.f32.mrf.mxu0
        %v1215 = vadd.f32 0.0, %v1214
        %1216 = vmatmul.bf16.gmra.mxu0 %v1138
        %v1217 = vpop.f32.mrf.mxu0
        %v1218 = vadd.f32 0.0, %v1217
        %v1219 = vpop.f32.mrf.mxu0
        %v1220 = vadd.f32 0.0, %v1219
        %1221 = vmatmul.bf16.gmra.mxu0 %v1139
        %v1222 = vpop.f32.mrf.mxu0
        %v1223 = vadd.f32 0.0, %v1222
        %v1224 = vpop.f32.mrf.mxu0
        %1225 = vdwg.mxu0
        %v1226 = vmax.f32 %v1026, %v1163
        %v1227 = vmax.f32 %v1027, %v1165
        %v1228 = vmax.f32 %v1028, %v1168
        %v1229 = vmax.f32 %v1029, %v1170
        %v1230 = vmax.f32 %v1030, %v1173
        %v1231 = vmax.f32 %v1031, %v1175
        %v1232 = vmax.f32 %v1032, %v1178
        %v1233 = vmax.f32 %v1033, %v1180
        %v1234 = vmax.f32 %v1034, %v1183
        %v1235 = vmax.f32 %v1035, %v1185
        %v1236 = vmax.f32 %v1036, %v1188
        %v1237 = vmax.f32 %v1037, %v1190
        %v1238 = vmax.f32 %v1038, %v1193
        %v1239 = vmax.f32 %v1039, %v1195
        %v1240 = vmax.f32 %v1040, %v1198
        %v1241 = vmax.f32 %v1041, %v1200
        %v1242 = vmax.f32 %v1042, %v1203
        %v1243 = vmax.f32 %v1043, %v1205
        %v1244 = vmax.f32 %v1044, %v1208
        %v1245 = vmax.f32 %v1045, %v1210
        %v1246 = vmax.f32 %v1046, %v1213
        %v1247 = vmax.f32 %v1047, %v1215
        %v1248 = vmax.f32 %v1048, %v1218
        %v1249 = vmax.f32 %v1049, %v1220
        %v1250 = vmax.f32 %v1050, %v1223
        %s1251 = scalar_lea.vmem %s585, 300 [#allocation2]
        %v1252 = vld [vmem:[%s1251] sm:$0xf]
        %v1253 = vld [vmem:[%s1251 + $0x4] sm:$0xf]
        %v1254 = vld [vmem:[%s1251 + $0x8] sm:$0xf]
        %v1255 = vld [vmem:[%s1251 + $0xc] sm:$0xf]
        %v1256 = vld [vmem:[%s1251 + $0x10] sm:$0xf]
        %v1257 = vld [vmem:[%s1251 + $0x14] sm:$0xf]
        %v1258 = vld [vmem:[%s1251 + $0x18] sm:$0xf]
        %v1259 = vld [vmem:[%s1251 + $0x1c] sm:$0xf]
        %v1260 = vld [vmem:[%s1251 + $0x20] sm:$0xf]
        %v1261 = vld [vmem:[%s1251 + $0x24] sm:$0xf]
        %v1262 = vld [vmem:[%s1251 + $0x28] sm:$0xf]
        %v1263 = vld [vmem:[%s1251 + $0x2c] sm:$0xf]
        %v1264 = vld [vmem:[%s1251 + $0x30] sm:$0xf]
        %v1265 = vld [vmem:[%s1251 + $0x34] sm:$0xf]
        %v1266 = vld [vmem:[%s1251 + $0x38] sm:$0xf]
        %v1267 = vld [vmem:[%s1251 + $0x3c] sm:$0xf]
        %v1268 = vld [vmem:[%s1251 + $0x40] sm:$0xf]
        %v1269 = vld [vmem:[%s1251 + $0x44] sm:$0xf]
        %v1270 = vld [vmem:[%s1251 + $0x48] sm:$0xf]
        %v1271 = vld [vmem:[%s1251 + $0x4c] sm:$0xf]
        %v1272 = vld [vmem:[%s1251 + $0x50] sm:$0xf]
        %v1273 = vld [vmem:[%s1251 + $0x54] sm:$0xf]
        %v1274 = vld [vmem:[%s1251 + $0x58] sm:$0xf]
        %v1275 = vld [vmem:[%s1251 + $0x5c] sm:$0xf]
        %v1276 = vld [vmem:[%s1251 + $0x60] sm:$0xf]
        %v1302 = vunpack.c.l.b16 %v1252
        %v1303 = vunpack.c.l.b16 %v1253
        %v1304 = vunpack.c.l.b16 %v1254
        %v1305 = vunpack.c.l.b16 %v1255
        %v1306 = vunpack.c.l.b16 %v1256
        %v1307 = vunpack.c.l.b16 %v1257
        %v1308 = vunpack.c.l.b16 %v1258
        %v1309 = vunpack.c.l.b16 %v1259
        %v1310 = vunpack.c.l.b16 %v1260
        %v1311 = vunpack.c.l.b16 %v1261
        %v1312 = vunpack.c.l.b16 %v1262
        %v1313 = vunpack.c.l.b16 %v1263
        %v1314 = vunpack.c.l.b16 %v1264
        %v1315 = vunpack.c.l.b16 %v1265
        %v1316 = vunpack.c.l.b16 %v1266
        %v1317 = vunpack.c.l.b16 %v1267
        %v1318 = vunpack.c.l.b16 %v1268
        %v1319 = vunpack.c.l.b16 %v1269
        %v1320 = vunpack.c.l.b16 %v1270
        %v1321 = vunpack.c.l.b16 %v1271
        %v1322 = vunpack.c.l.b16 %v1272
        %v1323 = vunpack.c.l.b16 %v1273
        %v1324 = vunpack.c.l.b16 %v1274
        %v1325 = vunpack.c.l.b16 %v1275
        %v1326 = vunpack.c.l.b16 %v1276
        %v1327 = vpack.c.b16 %v1303, %v1302
        %v1328 = vpack.c.b16 %v1305, %v1304
        %v1329 = vpack.c.b16 %v1307, %v1306
        %v1330 = vpack.c.b16 %v1309, %v1308
        %v1331 = vpack.c.b16 %v1311, %v1310
        %v1332 = vpack.c.b16 %v1313, %v1312
        %v1333 = vpack.c.b16 %v1315, %v1314
        %v1334 = vpack.c.b16 %v1317, %v1316
        %v1335 = vpack.c.b16 %v1319, %v1318
        %v1336 = vpack.c.b16 %v1321, %v1320
        %v1337 = vpack.c.b16 %v1323, %v1322
        %v1338 = vpack.c.b16 %v1325, %v1324
        %v1339 = vpack.c.b16 %v1326, %v1326
        %1353 = vmatpush.bf16.msra.mxu0 %v769
        %1354 = vmatpush.bf16.msra.mxu0 %v768
        %1355 = vmatpush.bf16.msra.mxu0 %v767
        %1356 = vmatpush.bf16.msra.mxu0 %v766
        %1357 = vmatpush.bf16.msra.mxu0 %v765
        %1358 = vmatpush.bf16.msra.mxu0 %v764
        %1359 = vmatpush.bf16.msra.mxu0 %v763
        %1360 = vmatpush.bf16.msra.mxu0 %v762
        %1361 = vmatmul.bf16.gmra.mxu0 %v1327
        %v1362 = vpop.f32.mrf.mxu0
        %v1363 = vadd.f32 0.0, %v1362
        %v1364 = vpop.f32.mrf.mxu0
        %v1365 = vadd.f32 0.0, %v1364
        %1366 = vmatmul.bf16.gmra.mxu0 %v1328
        %v1367 = vpop.f32.mrf.mxu0
        %v1368 = vadd.f32 0.0, %v1367
        %v1369 = vpop.f32.mrf.mxu0
        %v1370 = vadd.f32 0.0, %v1369
        %1371 = vmatmul.bf16.gmra.mxu0 %v1329
        %v1372 = vpop.f32.mrf.mxu0
        %v1373 = vadd.f32 0.0, %v1372
        %v1374 = vpop.f32.mrf.mxu0
        %v1375 = vadd.f32 0.0, %v1374
        %1376 = vmatmul.bf16.gmra.mxu0 %v1330
        %v1377 = vpop.f32.mrf.mxu0
        %v1378 = vadd.f32 0.0, %v1377
        %v1379 = vpop.f32.mrf.mxu0
        %v1380 = vadd.f32 0.0, %v1379
        %1381 = vmatmul.bf16.gmra.mxu0 %v1331
        %v1382 = vpop.f32.mrf.mxu0
        %v1383 = vadd.f32 0.0, %v1382
        %v1384 = vpop.f32.mrf.mxu0
        %v1385 = vadd.f32 0.0, %v1384
        %1386 = vmatmul.bf16.gmra.mxu0 %v1332
        %v1387 = vpop.f32.mrf.mxu0
        %v1388 = vadd.f32 0.0, %v1387
        %v1389 = vpop.f32.mrf.mxu0
        %v1390 = vadd.f32 0.0, %v1389
        %1391 = vmatmul.bf16.gmra.mxu0 %v1333
        %v1392 = vpop.f32.mrf.mxu0
        %v1393 = vadd.f32 0.0, %v1392
        %v1394 = vpop.f32.mrf.mxu0
        %v1395 = vadd.f32 0.0, %v1394
        %1396 = vmatmul.bf16.gmra.mxu0 %v1334
        %v1397 = vpop.f32.mrf.mxu0
        %v1398 = vadd.f32 0.0, %v1397
        %v1399 = vpop.f32.mrf.mxu0
        %v1400 = vadd.f32 0.0, %v1399
        %1401 = vmatmul.bf16.gmra.mxu0 %v1335
        %v1402 = vpop.f32.mrf.mxu0
        %v1403 = vadd.f32 0.0, %v1402
        %v1404 = vpop.f32.mrf.mxu0
        %v1405 = vadd.f32 0.0, %v1404
        %1406 = vmatmul.bf16.gmra.mxu0 %v1336
        %v1407 = vpop.f32.mrf.mxu0
        %v1408 = vadd.f32 0.0, %v1407
        %v1409 = vpop.f32.mrf.mxu0
        %v1410 = vadd.f32 0.0, %v1409
        %1411 = vmatmul.bf16.gmra.mxu0 %v1337
        %v1412 = vpop.f32.mrf.mxu0
        %v1413 = vadd.f32 0.0, %v1412
        %v1414 = vpop.f32.mrf.mxu0
        %v1415 = vadd.f32 0.0, %v1414
        %1416 = vmatmul.bf16.gmra.mxu0 %v1338
        %v1417 = vpop.f32.mrf.mxu0
        %v1418 = vadd.f32 0.0, %v1417
        %v1419 = vpop.f32.mrf.mxu0
        %v1420 = vadd.f32 0.0, %v1419
        %1421 = vmatmul.bf16.gmra.mxu0 %v1339
        %v1422 = vpop.f32.mrf.mxu0
        %v1423 = vadd.f32 0.0, %v1422
        %v1424 = vpop.f32.mrf.mxu0
        %1425 = vdwg.mxu0
        %v1426 = vmax.f32 %v1226, %v1363
        %v1427 = vmax.f32 %v1227, %v1365
        %v1428 = vmax.f32 %v1228, %v1368
        %v1429 = vmax.f32 %v1229, %v1370
        %v1430 = vmax.f32 %v1230, %v1373
        %v1431 = vmax.f32 %v1231, %v1375
        %v1432 = vmax.f32 %v1232, %v1378
        %v1433 = vmax.f32 %v1233, %v1380
        %v1434 = vmax.f32 %v1234, %v1383
        %v1435 = vmax.f32 %v1235, %v1385
        %v1436 = vmax.f32 %v1236, %v1388
        %v1437 = vmax.f32 %v1237, %v1390
        %v1438 = vmax.f32 %v1238, %v1393
        %v1439 = vmax.f32 %v1239, %v1395
        %v1440 = vmax.f32 %v1240, %v1398
        %v1441 = vmax.f32 %v1241, %v1400
        %v1442 = vmax.f32 %v1242, %v1403
        %v1443 = vmax.f32 %v1243, %v1405
        %v1444 = vmax.f32 %v1244, %v1408
        %v1445 = vmax.f32 %v1245, %v1410
        %v1446 = vmax.f32 %v1246, %v1413
        %v1447 = vmax.f32 %v1247, %v1415
        %v1448 = vmax.f32 %v1248, %v1418
        %v1449 = vmax.f32 %v1249, %v1420
        %v1450 = vmax.f32 %v1250, %v1423
        %v1451 = vld [vmem:[%s2] sm:$0x1]
        %v1453 = vperm.slane %v1451, 0
        %v1455 = vadd.f32 %v1426, %v1453
        %v1456 = vadd.f32 %v1427, %v1453
        %v1457 = vadd.f32 %v1428, %v1453
        %v1458 = vadd.f32 %v1429, %v1453
        %v1459 = vadd.f32 %v1430, %v1453
        %v1460 = vadd.f32 %v1431, %v1453
        %v1461 = vadd.f32 %v1432, %v1453
        %v1462 = vadd.f32 %v1433, %v1453
        %v1463 = vadd.f32 %v1434, %v1453
        %v1464 = vadd.f32 %v1435, %v1453
        %v1465 = vadd.f32 %v1436, %v1453
        %v1466 = vadd.f32 %v1437, %v1453
        %v1467 = vadd.f32 %v1438, %v1453
        %v1468 = vadd.f32 %v1439, %v1453
        %v1469 = vadd.f32 %v1440, %v1453
        %v1470 = vadd.f32 %v1441, %v1453
        %v1471 = vadd.f32 %v1442, %v1453
        %v1472 = vadd.f32 %v1443, %v1453
        %v1473 = vadd.f32 %v1444, %v1453
        %v1474 = vadd.f32 %v1445, %v1453
        %v1475 = vadd.f32 %v1446, %v1453
        %v1476 = vadd.f32 %v1447, %v1453
        %v1477 = vadd.f32 %v1448, %v1453
        %v1478 = vadd.f32 %v1449, %v1453
        %v1479 = vadd.f32 %v1450, %v1453
        %v1480 = vmax.f32 %v1455, 0.0
        %v1481 = vmax.f32 %v1456, 0.0
        %v1482 = vmax.f32 %v1457, 0.0
        %v1483 = vmax.f32 %v1458, 0.0
        %v1484 = vmax.f32 %v1459, 0.0
        %v1485 = vmax.f32 %v1460, 0.0
        %v1486 = vmax.f32 %v1461, 0.0
        %v1487 = vmax.f32 %v1462, 0.0
        %v1488 = vmax.f32 %v1463, 0.0
        %v1489 = vmax.f32 %v1464, 0.0
        %v1490 = vmax.f32 %v1465, 0.0
        %v1491 = vmax.f32 %v1466, 0.0
        %v1492 = vmax.f32 %v1467, 0.0
        %v1493 = vmax.f32 %v1468, 0.0
        %v1494 = vmax.f32 %v1469, 0.0
        %v1495 = vmax.f32 %v1470, 0.0
        %v1496 = vmax.f32 %v1471, 0.0
        %v1497 = vmax.f32 %v1472, 0.0
        %v1498 = vmax.f32 %v1473, 0.0
        %v1499 = vmax.f32 %v1474, 0.0
        %v1500 = vmax.f32 %v1475, 0.0
        %v1501 = vmax.f32 %v1476, 0.0
        %v1502 = vmax.f32 %v1477, 0.0
        %v1503 = vmax.f32 %v1478, 0.0
        %v1504 = vmax.f32 %v1479, 0.0
        %1505 = vst [vmem:[%s611] sm:$0xff] %v1480
        %1506 = vst [vmem:[%s611 + $0x8] sm:$0xff] %v1481
        %1507 = vst [vmem:[%s611 + $0x10] sm:$0xff] %v1482
        %1508 = vst [vmem:[%s611 + $0x18] sm:$0xff] %v1483
        %1509 = vst [vmem:[%s611 + $0x20] sm:$0xff] %v1484
        %1510 = vst [vmem:[%s611 + $0x28] sm:$0xff] %v1485
        %1511 = vst [vmem:[%s611 + $0x30] sm:$0xff] %v1486
        %1512 = vst [vmem:[%s611 + $0x38] sm:$0xff] %v1487
        %1513 = vst [vmem:[%s611 + $0x40] sm:$0xff] %v1488
        %1514 = vst [vmem:[%s611 + $0x48] sm:$0xff] %v1489
        %1515 = vst [vmem:[%s611 + $0x50] sm:$0xff] %v1490
        %1516 = vst [vmem:[%s611 + $0x58] sm:$0xff] %v1491
        %1517 = vst [vmem:[%s611 + $0x60] sm:$0xff] %v1492
        %1518 = vst [vmem:[%s611 + $0x68] sm:$0xff] %v1493
        %1519 = vst [vmem:[%s611 + $0x70] sm:$0xff] %v1494
        %1520 = vst [vmem:[%s611 + $0x78] sm:$0xff] %v1495
        %1521 = vst [vmem:[%s611 + $0x80] sm:$0xff] %v1496
        %1522 = vst [vmem:[%s611 + $0x88] sm:$0xff] %v1497
        %1523 = vst [vmem:[%s611 + $0x90] sm:$0xff] %v1498
        %1524 = vst [vmem:[%s611 + $0x98] sm:$0xff] %v1499
        %1525 = vst [vmem:[%s611 + $0xa0] sm:$0xff] %v1500
        %1526 = vst [vmem:[%s611 + $0xa8] sm:$0xff] %v1501
        %1527 = vst [vmem:[%s611 + $0xb0] sm:$0xff] %v1502
        %1528 = vst [vmem:[%s611 + $0xb8] sm:$0xff] %v1503
        %1529 = vst [vmem:[%s611 + $0xc0] sm:$0xff] %v1504
        %s1530 = smul.u32 25, %s14
        %p1531 = scmp.lt.s32.totalorder %s1530, 49
        %s1532 = scalar_select %p1531, %s1530, 49
        %s1533 = smul.addr %s1532, 8
        %s1534 = scalar_lea.vmem %s3, %s1533
        // Predicated region
        $region74: #{lenet5_forward.3} parent=68 // pred_check
          %p1535 = pneg %p100
        $region75: #{lenet5_forward.3} parent=68 // pred_check_branch
          %1537 = sbr.rel (%p1535) target = $region77
        $region76: #{lenet5_forward.3} parent=68 // pred_region
          %s1538 = smul.u32 25, %s14
        $region77: #{lenet5_forward.3} parent=68 // pred_fallthru
          _
      $region69: #{lenet5_forward.3} parent=5 // pred_fallthru
        _
      %p1539 = scmp.le.s32.totalorder 2, %s9
      // Predicated region
      $region78: #{lenet5_forward.3} parent=5 // pred_check
        %p1540 = pneg %p1539
      $region79: #{lenet5_forward.3} parent=5 // pred_check_branch
        %1542 = sbr.rel (%p1540) target = $region81
      $region80: #{lenet5_forward.3} parent=5 // pred_region
        %s1543 = ssub.s32 %s9, 2
        // Predicated region
        $region82: #{lenet5_forward.3} parent=80 // pred_check
          %p1544 = pneg %p106
        $region83: #{lenet5_forward.3} parent=80 // pred_check_branch
          %1546 = sbr.rel (%p1544) target = $region85
        $region84: #{lenet5_forward.3} parent=80 // pred_region
          %s1547 = smul.u32 25, %s15
          %p1548 = scmp.lt.s32.totalorder %s1547, 49
          %s1549 = scalar_select %p1548, %s1547, 49
          %s1550 = smul.addr %s1549, 8
          %s1551 = scalar_lea.vmem %s3, %s1550
        $region85: #{lenet5_forward.3} parent=80 // pred_fallthru
          _
      $region81: #{lenet5_forward.3} parent=5 // pred_fallthru
        _
    $region6: #{lenet5_forward.3} parent=1 // loop_footer
      %s13 = sadd.s32 1, %s9
    $region7: #{lenet5_forward.3} parent=1 // loop_footer_branch
      %8 = sbr.rel target = $region3
    $region8: #{lenet5_forward.3} parent=1 // loop_exit
      _

// kernel: lenet5_forward.4
$region0: #{lenet5_forward.4}
  #allocation0 [shape = 'u32[]', space=smem, size = 0x4, offset = 0x4, fixed_abs, tag = 'smem constant byte address 0x4 - core index']
  #allocation1 [shape = 'u32[72,128]{1,0:T(1,128)}', space=vmem, size = 0x9000, scoped, tag = 'internal scratch']
  %s0 = inlined_call_operand.vmem [shape: bf16[4,56,256], index: 0, kind: input, shape index: {}]
  %s1 = inlined_call_operand.vmem [shape: bf16[256,128], index: 1, kind: input, shape index: {}]
  %s2 = inlined_call_operand.vmem [shape: f32[1,128], index: 2, kind: input, shape index: {}]
  %s3 = inlined_call_operand.vmem [shape: f32[56,128], index: 3, kind: output, shape index: {}]
  %s4 = sld [smem:[#allocation0]]
  $region22: #{lenet5_forward.4} parent=0
    _
  %s6 = ssub.s32 1, %s4
  %s7 = scalar_select 0, %s6, %s4
  // Predicated region
  $region2: #{lenet5_forward.4} parent=0 // pred_check
    _
  $region3: #{lenet5_forward.4} parent=0 // pred_check_branch
    %9 = sbr.rel (0) target = $region5
  $region4: #{lenet5_forward.4} parent=0 // pred_region
    _
  $region5: #{lenet5_forward.4} parent=0 // pred_fallthru
    _
  // Predicated region
  $region6: #{lenet5_forward.4} parent=0 // pred_check
    _
  $region7: #{lenet5_forward.4} parent=0 // pred_check_branch
    %11 = sbr.rel (0) target = $region9
  $region8: #{lenet5_forward.4} parent=0 // pred_region
    _
  $region9: #{lenet5_forward.4} parent=0 // pred_fallthru
    _
  // Predicated region
  $region10: #{lenet5_forward.4} parent=0 // pred_check
    _
  $region11: #{lenet5_forward.4} parent=0 // pred_check_branch
    %13 = sbr.rel (0) target = $region13
  $region12: #{lenet5_forward.4} parent=0 // pred_region
    _
  $region13: #{lenet5_forward.4} parent=0 // pred_fallthru
    _
  %v14 = vld [vmem:[%s1] sm:$0xf]
  %v15 = vld [vmem:[%s1 + $0x4] sm:$0xf]
  %v16 = vld [vmem:[%s1 + $0x8] sm:$0xf]
  %v17 = vld [vmem:[%s1 + $0xc] sm:$0xf]
  %v18 = vld [vmem:[%s1 + $0x10] sm:$0xf]
  %v19 = vld [vmem:[%s1 + $0x14] sm:$0xf]
  %v20 = vld [vmem:[%s1 + $0x18] sm:$0xf]
  %v21 = vld [vmem:[%s1 + $0x1c] sm:$0xf]
  %v22 = vld [vmem:[%s1 + $0x20] sm:$0xf]
  %v23 = vld [vmem:[%s1 + $0x24] sm:$0xf]
  %v24 = vld [vmem:[%s1 + $0x28] sm:$0xf]
  %v25 = vld [vmem:[%s1 + $0x2c] sm:$0xf]
  %v26 = vld [vmem:[%s1 + $0x30] sm:$0xf]
  %v27 = vld [vmem:[%s1 + $0x34] sm:$0xf]
  %v28 = vld [vmem:[%s1 + $0x38] sm:$0xf]
  %v29 = vld [vmem:[%s1 + $0x3c] sm:$0xf]
  %v30 = vld [vmem:[%s1 + $0x40] sm:$0xf]
  %v31 = vld [vmem:[%s1 + $0x44] sm:$0xf]
  %v32 = vld [vmem:[%s1 + $0x48] sm:$0xf]
  %v33 = vld [vmem:[%s1 + $0x4c] sm:$0xf]
  %v34 = vld [vmem:[%s1 + $0x50] sm:$0xf]
  %v35 = vld [vmem:[%s1 + $0x54] sm:$0xf]
  %v36 = vld [vmem:[%s1 + $0x58] sm:$0xf]
  %v37 = vld [vmem:[%s1 + $0x5c] sm:$0xf]
  %v38 = vld [vmem:[%s1 + $0x60] sm:$0xf]
  %v39 = vld [vmem:[%s1 + $0x64] sm:$0xf]
  %v40 = vld [vmem:[%s1 + $0x68] sm:$0xf]
  %v41 = vld [vmem:[%s1 + $0x6c] sm:$0xf]
  %v42 = vld [vmem:[%s1 + $0x70] sm:$0xf]
  %v43 = vld [vmem:[%s1 + $0x74] sm:$0xf]
  %v44 = vld [vmem:[%s1 + $0x78] sm:$0xf]
  %v45 = vld [vmem:[%s1 + $0x7c] sm:$0xf]
  %v46 = vld [vmem:[%s0] sm:$0xff]
  %v47 = vld [vmem:[%s0 + $0x8] sm:$0xff]
  %v48 = vld [vmem:[%s0 + $0x10] sm:$0xff]
  %v49 = vld [vmem:[%s0 + $0x18] sm:$0xff]
  %v50 = vld [vmem:[%s0 + $0x20] sm:$0xff]
  %v51 = vld [vmem:[%s0 + $0x28] sm:$0xff]
  %v52 = vld [vmem:[%s0 + $0x30] sm:$0xff]
  %v60 = vunpack.c.l.b16 %v46
  %v61 = vunpack.c.h.b16 %v46
  %v62 = vunpack.c.l.b16 %v47
  %v63 = vunpack.c.h.b16 %v47
  %v64 = vunpack.c.l.b16 %v48
  %v65 = vunpack.c.h.b16 %v48
  %v66 = vunpack.c.l.b16 %v49
  %v67 = vunpack.c.h.b16 %v49
  %v68 = vunpack.c.l.b16 %v50
  %v69 = vunpack.c.h.b16 %v50
  %v70 = vunpack.c.l.b16 %v51
  %v71 = vunpack.c.h.b16 %v51
  %v72 = vunpack.c.l.b16 %v52
  %v73 = vunpack.c.h.b16 %v52
  %v74 = vpack.c.b16 %v62, %v60
  %v75 = vpack.c.b16 %v63, %v61
  %v76 = vpack.c.b16 %v66, %v64
  %v77 = vpack.c.b16 %v67, %v65
  %v78 = vpack.c.b16 %v70, %v68
  %v79 = vpack.c.b16 %v71, %v69
  %v80 = vpack.c.b16 %v72, %v72
  %v81 = vpack.c.b16 %v73, %v73
  %v122 = vunpack.c.l.b16 %v14
  %v123 = vunpack.c.l.b16 %v15
  %v124 = vunpack.c.l.b16 %v16
  %v125 = vunpack.c.l.b16 %v17
  %v126 = vunpack.c.l.b16 %v18
  %v127 = vunpack.c.l.b16 %v19
  %v128 = vunpack.c.l.b16 %v20
  %v129 = vunpack.c.l.b16 %v21
  %v130 = vunpack.c.l.b16 %v22
  %v131 = vunpack.c.l.b16 %v23
  %v132 = vunpack.c.l.b16 %v24
  %v133 = vunpack.c.l.b16 %v25
  %v134 = vunpack.c.l.b16 %v26
  %v135 = vunpack.c.l.b16 %v27
  %v136 = vunpack.c.l.b16 %v28
  %v137 = vunpack.c.l.b16 %v29
  %v138 = vunpack.c.l.b16 %v30
  %v139 = vunpack.c.l.b16 %v31
  %v140 = vunpack.c.l.b16 %v32
  %v141 = vunpack.c.l.b16 %v33
  %v142 = vunpack.c.l.b16 %v34
  %v143 = vunpack.c.l.b16 %v35
  %v144 = vunpack.c.l.b16 %v36
  %v145 = vunpack.c.l.b16 %v37
  %v146 = vunpack.c.l.b16 %v38
  %v147 = vunpack.c.l.b16 %v39
  %v148 = vunpack.c.l.b16 %v40
  %v149 = vunpack.c.l.b16 %v41
  %v150 = vunpack.c.l.b16 %v42
  %v151 = vunpack.c.l.b16 %v43
  %v152 = vunpack.c.l.b16 %v44
  %v153 = vunpack.c.l.b16 %v45
  %v154 = vpack.c.b16 %v123, %v122
  %v155 = vpack.c.b16 %v125, %v124
  %v156 = vpack.c.b16 %v127, %v126
  %v157 = vpack.c.b16 %v129, %v128
  %v158 = vpack.c.b16 %v131, %v130
  %v159 = vpack.c.b16 %v133, %v132
  %v160 = vpack.c.b16 %v135, %v134
  %v161 = vpack.c.b16 %v137, %v136
  %v162 = vpack.c.b16 %v139, %v138
  %v163 = vpack.c.b16 %v141, %v140
  %v164 = vpack.c.b16 %v143, %v142
  %v165 = vpack.c.b16 %v145, %v144
  %v166 = vpack.c.b16 %v147, %v146
  %v167 = vpack.c.b16 %v149, %v148
  %v168 = vpack.c.b16 %v151, %v150
  %v169 = vpack.c.b16 %v153, %v152
  %186 = vmatpush.bf16.msra.mxu0 %v161
  %187 = vmatpush.bf16.msra.mxu0 %v160
  %188 = vmatpush.bf16.msra.mxu0 %v159
  %189 = vmatpush.bf16.msra.mxu0 %v158
  %190 = vmatpush.bf16.msra.mxu0 %v157
  %191 = vmatpush.bf16.msra.mxu0 %v156
  %192 = vmatpush.bf16.msra.mxu0 %v155
  %193 = vmatpush.bf16.msra.mxu0 %v154
  %194 = vmatmul.bf16.gmra.mxu0 %v74
  %v195 = vpop.f32.mrf.mxu0
  %v196 = vadd.f32 0.0, %v195
  %v197 = vpop.f32.mrf.mxu0
  %v198 = vadd.f32 0.0, %v197
  %199 = vmatmul.bf16.gmra.mxu0 %v76
  %v200 = vpop.f32.mrf.mxu0
  %v201 = vadd.f32 0.0, %v200
  %v202 = vpop.f32.mrf.mxu0
  %v203 = vadd.f32 0.0, %v202
  %204 = vmatmul.bf16.gmra.mxu0 %v78
  %v205 = vpop.f32.mrf.mxu0
  %v206 = vadd.f32 0.0, %v205
  %v207 = vpop.f32.mrf.mxu0
  %v208 = vadd.f32 0.0, %v207
  %209 = vmatmul.bf16.gmra.mxu0 %v80
  %v210 = vpop.f32.mrf.mxu0
  %v211 = vadd.f32 0.0, %v210
  %v212 = vpop.f32.mrf.mxu0
  %213 = vdwg.mxu0
  %214 = vmatpush.bf16.msra.mxu0 %v169
  %215 = vmatpush.bf16.msra.mxu0 %v168
  %216 = vmatpush.bf16.msra.mxu0 %v167
  %217 = vmatpush.bf16.msra.mxu0 %v166
  %218 = vmatpush.bf16.msra.mxu0 %v165
  %219 = vmatpush.bf16.msra.mxu0 %v164
  %220 = vmatpush.bf16.msra.mxu0 %v163
  %221 = vmatpush.bf16.msra.mxu0 %v162
  %222 = vmatmul.bf16.gmra.mxu0 %v75
  %v223 = vpop.f32.mrf.mxu0
  %v224 = vadd.f32 %v196, %v223
  %v225 = vpop.f32.mrf.mxu0
  %v226 = vadd.f32 %v198, %v225
  %227 = vmatmul.bf16.gmra.mxu0 %v77
  %v228 = vpop.f32.mrf.mxu0
  %v229 = vadd.f32 %v201, %v228
  %v230 = vpop.f32.mrf.mxu0
  %v231 = vadd.f32 %v203, %v230
  %232 = vmatmul.bf16.gmra.mxu0 %v79
  %v233 = vpop.f32.mrf.mxu0
  %v234 = vadd.f32 %v206, %v233
  %v235 = vpop.f32.mrf.mxu0
  %v236 = vadd.f32 %v208, %v235
  %237 = vmatmul.bf16.gmra.mxu0 %v81
  %v238 = vpop.f32.mrf.mxu0
  %v239 = vadd.f32 %v211, %v238
  %v240 = vpop.f32.mrf.mxu0
  %241 = vdwg.mxu0
  %s242 = scalar_lea.vmem %s0, 56
  %v243 = vld [vmem:[%s242] sm:$0xff]
  %v244 = vld [vmem:[%s242 + $0x8] sm:$0xff]
  %v245 = vld [vmem:[%s242 + $0x10] sm:$0xff]
  %v246 = vld [vmem:[%s242 + $0x18] sm:$0xff]
  %v247 = vld [vmem:[%s242 + $0x20] sm:$0xff]
  %v248 = vld [vmem:[%s242 + $0x28] sm:$0xff]
  %v249 = vld [vmem:[%s242 + $0x30] sm:$0xff]
  %v257 = vunpack.c.l.b16 %v243
  %v258 = vunpack.c.h.b16 %v243
  %v259 = vunpack.c.l.b16 %v244
  %v260 = vunpack.c.h.b16 %v244
  %v261 = vunpack.c.l.b16 %v245
  %v262 = vunpack.c.h.b16 %v245
  %v263 = vunpack.c.l.b16 %v246
  %v264 = vunpack.c.h.b16 %v246
  %v265 = vunpack.c.l.b16 %v247
  %v266 = vunpack.c.h.b16 %v247
  %v267 = vunpack.c.l.b16 %v248
  %v268 = vunpack.c.h.b16 %v248
  %v269 = vunpack.c.l.b16 %v249
  %v270 = vunpack.c.h.b16 %v249
  %v271 = vpack.c.b16 %v259, %v257
  %v272 = vpack.c.b16 %v260, %v258
  %v273 = vpack.c.b16 %v263, %v261
  %v274 = vpack.c.b16 %v264, %v262
  %v275 = vpack.c.b16 %v267, %v265
  %v276 = vpack.c.b16 %v268, %v266
  %v277 = vpack.c.b16 %v269, %v269
  %v278 = vpack.c.b16 %v270, %v270
  %287 = vmatpush.bf16.msra.mxu0 %v161
  %288 = vmatpush.bf16.msra.mxu0 %v160
  %289 = vmatpush.bf16.msra.mxu0 %v159
  %290 = vmatpush.bf16.msra.mxu0 %v158
  %291 = vmatpush.bf16.msra.mxu0 %v157
  %292 = vmatpush.bf16.msra.mxu0 %v156
  %293 = vmatpush.bf16.msra.mxu0 %v155
  %294 = vmatpush.bf16.msra.mxu0 %v154
  %295 = vmatmul.bf16.gmra.mxu0 %v271
  %v296 = vpop.f32.mrf.mxu0
  %v297 = vadd.f32 0.0, %v296
  %v298 = vpop.f32.mrf.mxu0
  %v299 = vadd.f32 0.0, %v298
  %300 = vmatmul.bf16.gmra.mxu0 %v273
  %v301 = vpop.f32.mrf.mxu0
  %v302 = vadd.f32 0.0, %v301
  %v303 = vpop.f32.mrf.mxu0
  %v304 = vadd.f32 0.0, %v303
  %305 = vmatmul.bf16.gmra.mxu0 %v275
  %v306 = vpop.f32.mrf.mxu0
  %v307 = vadd.f32 0.0, %v306
  %v308 = vpop.f32.mrf.mxu0
  %v309 = vadd.f32 0.0, %v308
  %310 = vmatmul.bf16.gmra.mxu0 %v277
  %v311 = vpop.f32.mrf.mxu0
  %v312 = vadd.f32 0.0, %v311
  %v313 = vpop.f32.mrf.mxu0
  %314 = vdwg.mxu0
  %315 = vmatpush.bf16.msra.mxu0 %v169
  %316 = vmatpush.bf16.msra.mxu0 %v168
  %317 = vmatpush.bf16.msra.mxu0 %v167
  %318 = vmatpush.bf16.msra.mxu0 %v166
  %319 = vmatpush.bf16.msra.mxu0 %v165
  %320 = vmatpush.bf16.msra.mxu0 %v164
  %321 = vmatpush.bf16.msra.mxu0 %v163
  %322 = vmatpush.bf16.msra.mxu0 %v162
  %323 = vmatmul.bf16.gmra.mxu0 %v272
  %v324 = vpop.f32.mrf.mxu0
  %v325 = vadd.f32 %v297, %v324
  %v326 = vpop.f32.mrf.mxu0
  %v327 = vadd.f32 %v299, %v326
  %328 = vmatmul.bf16.gmra.mxu0 %v274
  %v329 = vpop.f32.mrf.mxu0
  %v330 = vadd.f32 %v302, %v329
  %v331 = vpop.f32.mrf.mxu0
  %v332 = vadd.f32 %v304, %v331
  %333 = vmatmul.bf16.gmra.mxu0 %v276
  %v334 = vpop.f32.mrf.mxu0
  %v335 = vadd.f32 %v307, %v334
  %v336 = vpop.f32.mrf.mxu0
  %v337 = vadd.f32 %v309, %v336
  %338 = vmatmul.bf16.gmra.mxu0 %v278
  %v339 = vpop.f32.mrf.mxu0
  %v340 = vadd.f32 %v312, %v339
  %v341 = vpop.f32.mrf.mxu0
  %342 = vdwg.mxu0
  %v343 = vmax.f32 %v224, %v325
  %v344 = vmax.f32 %v226, %v327
  %v345 = vmax.f32 %v229, %v330
  %v346 = vmax.f32 %v231, %v332
  %v347 = vmax.f32 %v234, %v335
  %v348 = vmax.f32 %v236, %v337
  %v349 = vmax.f32 %v239, %v340
  %s350 = scalar_lea.vmem %s0, 112
  %v351 = vld [vmem:[%s350] sm:$0xff]
  %v352 = vld [vmem:[%s350 + $0x8] sm:$0xff]
  %v353 = vld [vmem:[%s350 + $0x10] sm:$0xff]
  %v354 = vld [vmem:[%s350 + $0x18] sm:$0xff]
  %v355 = vld [vmem:[%s350 + $0x20] sm:$0xff]
  %v356 = vld [vmem:[%s350 + $0x28] sm:$0xff]
  %v357 = vld [vmem:[%s350 + $0x30] sm:$0xff]
  %v365 = vunpack.c.l.b16 %v351
  %v366 = vunpack.c.h.b16 %v351
  %v367 = vunpack.c.l.b16 %v352
  %v368 = vunpack.c.h.b16 %v352
  %v369 = vunpack.c.l.b16 %v353
  %v370 = vunpack.c.h.b16 %v353
  %v371 = vunpack.c.l.b16 %v354
  %v372 = vunpack.c.h.b16 %v354
  %v373 = vunpack.c.l.b16 %v355
  %v374 = vunpack.c.h.b16 %v355
  %v375 = vunpack.c.l.b16 %v356
  %v376 = vunpack.c.h.b16 %v356
  %v377 = vunpack.c.l.b16 %v357
  %v378 = vunpack.c.h.b16 %v357
  %v379 = vpack.c.b16 %v367, %v365
  %v380 = vpack.c.b16 %v368, %v366
  %v381 = vpack.c.b16 %v371, %v369
  %v382 = vpack.c.b16 %v372, %v370
  %v383 = vpack.c.b16 %v375, %v373
  %v384 = vpack.c.b16 %v376, %v374
  %v385 = vpack.c.b16 %v377, %v377
  %v386 = vpack.c.b16 %v378, %v378
  %395 = vmatpush.bf16.msra.mxu0 %v161
  %396 = vmatpush.bf16.msra.mxu0 %v160
  %397 = vmatpush.bf16.msra.mxu0 %v159
  %398 = vmatpush.bf16.msra.mxu0 %v158
  %399 = vmatpush.bf16.msra.mxu0 %v157
  %400 = vmatpush.bf16.msra.mxu0 %v156
  %401 = vmatpush.bf16.msra.mxu0 %v155
  %402 = vmatpush.bf16.msra.mxu0 %v154
  %403 = vmatmul.bf16.gmra.mxu0 %v379
  %v404 = vpop.f32.mrf.mxu0
  %v405 = vadd.f32 0.0, %v404
  %v406 = vpop.f32.mrf.mxu0
  %v407 = vadd.f32 0.0, %v406
  %408 = vmatmul.bf16.gmra.mxu0 %v381
  %v409 = vpop.f32.mrf.mxu0
  %v410 = vadd.f32 0.0, %v409
  %v411 = vpop.f32.mrf.mxu0
  %v412 = vadd.f32 0.0, %v411
  %413 = vmatmul.bf16.gmra.mxu0 %v383
  %v414 = vpop.f32.mrf.mxu0
  %v415 = vadd.f32 0.0, %v414
  %v416 = vpop.f32.mrf.mxu0
  %v417 = vadd.f32 0.0, %v416
  %418 = vmatmul.bf16.gmra.mxu0 %v385
  %v419 = vpop.f32.mrf.mxu0
  %v420 = vadd.f32 0.0, %v419
  %v421 = vpop.f32.mrf.mxu0
  %422 = vdwg.mxu0
  %423 = vmatpush.bf16.msra.mxu0 %v169
  %424 = vmatpush.bf16.msra.mxu0 %v168
  %425 = vmatpush.bf16.msra.mxu0 %v167
  %426 = vmatpush.bf16.msra.mxu0 %v166
  %427 = vmatpush.bf16.msra.mxu0 %v165
  %428 = vmatpush.bf16.msra.mxu0 %v164
  %429 = vmatpush.bf16.msra.mxu0 %v163
  %430 = vmatpush.bf16.msra.mxu0 %v162
  %431 = vmatmul.bf16.gmra.mxu0 %v380
  %v432 = vpop.f32.mrf.mxu0
  %v433 = vadd.f32 %v405, %v432
  %v434 = vpop.f32.mrf.mxu0
  %v435 = vadd.f32 %v407, %v434
  %436 = vmatmul.bf16.gmra.mxu0 %v382
  %v437 = vpop.f32.mrf.mxu0
  %v438 = vadd.f32 %v410, %v437
  %v439 = vpop.f32.mrf.mxu0
  %v440 = vadd.f32 %v412, %v439
  %441 = vmatmul.bf16.gmra.mxu0 %v384
  %v442 = vpop.f32.mrf.mxu0
  %v443 = vadd.f32 %v415, %v442
  %v444 = vpop.f32.mrf.mxu0
  %v445 = vadd.f32 %v417, %v444
  %446 = vmatmul.bf16.gmra.mxu0 %v386
  %v447 = vpop.f32.mrf.mxu0
  %v448 = vadd.f32 %v420, %v447
  %v449 = vpop.f32.mrf.mxu0
  %450 = vdwg.mxu0
  %v451 = vmax.f32 %v343, %v433
  %v452 = vmax.f32 %v344, %v435
  %v453 = vmax.f32 %v345, %v438
  %v454 = vmax.f32 %v346, %v440
  %v455 = vmax.f32 %v347, %v443
  %v456 = vmax.f32 %v348, %v445
  %v457 = vmax.f32 %v349, %v448
  %s458 = scalar_lea.vmem %s0, 168
  %v459 = vld [vmem:[%s458] sm:$0xff]
  %v460 = vld [vmem:[%s458 + $0x8] sm:$0xff]
  %v461 = vld [vmem:[%s458 + $0x10] sm:$0xff]
  %v462 = vld [vmem:[%s458 + $0x18] sm:$0xff]
  %v463 = vld [vmem:[%s458 + $0x20] sm:$0xff]
  %v464 = vld [vmem:[%s458 + $0x28] sm:$0xff]
  %v465 = vld [vmem:[%s458 + $0x30] sm:$0xff]
  %v473 = vunpack.c.l.b16 %v459
  %v474 = vunpack.c.h.b16 %v459
  %v475 = vunpack.c.l.b16 %v460
  %v476 = vunpack.c.h.b16 %v460
  %v477 = vunpack.c.l.b16 %v461
  %v478 = vunpack.c.h.b16 %v461
  %v479 = vunpack.c.l.b16 %v462
  %v480 = vunpack.c.h.b16 %v462
  %v481 = vunpack.c.l.b16 %v463
  %v482 = vunpack.c.h.b16 %v463
  %v483 = vunpack.c.l.b16 %v464
  %v484 = vunpack.c.h.b16 %v464
  %v485 = vunpack.c.l.b16 %v465
  %v486 = vunpack.c.h.b16 %v465
  %v487 = vpack.c.b16 %v475, %v473
  %v488 = vpack.c.b16 %v476, %v474
  %v489 = vpack.c.b16 %v479, %v477
  %v490 = vpack.c.b16 %v480, %v478
  %v491 = vpack.c.b16 %v483, %v481
  %v492 = vpack.c.b16 %v484, %v482
  %v493 = vpack.c.b16 %v485, %v485
  %v494 = vpack.c.b16 %v486, %v486
  %503 = vmatpush.bf16.msra.mxu0 %v161
  %504 = vmatpush.bf16.msra.mxu0 %v160
  %505 = vmatpush.bf16.msra.mxu0 %v159
  %506 = vmatpush.bf16.msra.mxu0 %v158
  %507 = vmatpush.bf16.msra.mxu0 %v157
  %508 = vmatpush.bf16.msra.mxu0 %v156
  %509 = vmatpush.bf16.msra.mxu0 %v155
  %510 = vmatpush.bf16.msra.mxu0 %v154
  %511 = vmatmul.bf16.gmra.mxu0 %v487
  %v512 = vpop.f32.mrf.mxu0
  %v513 = vadd.f32 0.0, %v512
  %v514 = vpop.f32.mrf.mxu0
  %v515 = vadd.f32 0.0, %v514
  %516 = vmatmul.bf16.gmra.mxu0 %v489
  %v517 = vpop.f32.mrf.mxu0
  %v518 = vadd.f32 0.0, %v517
  %v519 = vpop.f32.mrf.mxu0
  %v520 = vadd.f32 0.0, %v519
  %521 = vmatmul.bf16.gmra.mxu0 %v491
  %v522 = vpop.f32.mrf.mxu0
  %v523 = vadd.f32 0.0, %v522
  %v524 = vpop.f32.mrf.mxu0
  %v525 = vadd.f32 0.0, %v524
  %526 = vmatmul.bf16.gmra.mxu0 %v493
  %v527 = vpop.f32.mrf.mxu0
  %v528 = vadd.f32 0.0, %v527
  %v529 = vpop.f32.mrf.mxu0
  %530 = vdwg.mxu0
  %531 = vmatpush.bf16.msra.mxu0 %v169
  %532 = vmatpush.bf16.msra.mxu0 %v168
  %533 = vmatpush.bf16.msra.mxu0 %v167
  %534 = vmatpush.bf16.msra.mxu0 %v166
  %535 = vmatpush.bf16.msra.mxu0 %v165
  %536 = vmatpush.bf16.msra.mxu0 %v164
  %537 = vmatpush.bf16.msra.mxu0 %v163
  %538 = vmatpush.bf16.msra.mxu0 %v162
  %539 = vmatmul.bf16.gmra.mxu0 %v488
  %v540 = vpop.f32.mrf.mxu0
  %v541 = vadd.f32 %v513, %v540
  %v542 = vpop.f32.mrf.mxu0
  %v543 = vadd.f32 %v515, %v542
  %544 = vmatmul.bf16.gmra.mxu0 %v490
  %v545 = vpop.f32.mrf.mxu0
  %v546 = vadd.f32 %v518, %v545
  %v547 = vpop.f32.mrf.mxu0
  %v548 = vadd.f32 %v520, %v547
  %549 = vmatmul.bf16.gmra.mxu0 %v492
  %v550 = vpop.f32.mrf.mxu0
  %v551 = vadd.f32 %v523, %v550
  %v552 = vpop.f32.mrf.mxu0
  %v553 = vadd.f32 %v525, %v552
  %554 = vmatmul.bf16.gmra.mxu0 %v494
  %v555 = vpop.f32.mrf.mxu0
  %v556 = vadd.f32 %v528, %v555
  %v557 = vpop.f32.mrf.mxu0
  %558 = vdwg.mxu0
  %v559 = vmax.f32 %v451, %v541
  %v560 = vmax.f32 %v452, %v543
  %v561 = vmax.f32 %v453, %v546
  %v562 = vmax.f32 %v454, %v548
  %v563 = vmax.f32 %v455, %v551
  %v564 = vmax.f32 %v456, %v553
  %v565 = vmax.f32 %v457, %v556
  %v566 = vld [vmem:[%s2] sm:$0x1]
  %v568 = vperm.slane %v566, 0
  %v570 = vadd.f32 %v559, %v568
  %v571 = vadd.f32 %v560, %v568
  %v572 = vadd.f32 %v561, %v568
  %v573 = vadd.f32 %v562, %v568
  %v574 = vadd.f32 %v563, %v568
  %v575 = vadd.f32 %v564, %v568
  %v576 = vadd.f32 %v565, %v568
  %v577 = vmax.f32 %v570, 0.0
  %v578 = vmax.f32 %v571, 0.0
  %v579 = vmax.f32 %v572, 0.0
  %v580 = vmax.f32 %v573, 0.0
  %v581 = vmax.f32 %v574, 0.0
  %v582 = vmax.f32 %v575, 0.0
  %v583 = vmax.f32 %v576, 0.0
  %584 = vst [vmem:[%s3] sm:$0xff] %v577
  %585 = vst [vmem:[%s3 + $0x8] sm:$0xff] %v578
  %586 = vst [vmem:[%s3 + $0x10] sm:$0xff] %v579
  %587 = vst [vmem:[%s3 + $0x18] sm:$0xff] %v580
  %588 = vst [vmem:[%s3 + $0x20] sm:$0xff] %v581
  %589 = vst [vmem:[%s3 + $0x28] sm:$0xff] %v582
  %590 = vst [vmem:[%s3 + $0x30] sm:$0xff] %v583
  // Predicated region
  $region14: #{lenet5_forward.4} parent=0 // pred_check
    _
  $region15: #{lenet5_forward.4} parent=0 // pred_check_branch
    %592 = sbr.rel (0) target = $region17
  $region16: #{lenet5_forward.4} parent=0 // pred_region
    _
  $region17: #{lenet5_forward.4} parent=0 // pred_fallthru
    _
  // Predicated region
  $region18: #{lenet5_forward.4} parent=0 // pred_check
    _
  $region19: #{lenet5_forward.4} parent=0 // pred_check_branch
    %594 = sbr.rel (0) target = $region21
  $region20: #{lenet5_forward.4} parent=0 // pred_region
    _
  $region21: #{lenet5_forward.4} parent=0 // pred_fallthru
    _

// kernel: lenet5_forward.5
$region0: #{lenet5_forward.5}
  #allocation0 [shape = 'u32[]', space=smem, size = 0x4, offset = 0x4, fixed_abs, tag = 'smem constant byte address 0x4 - core index']
  #allocation1 [shape = 'u32[72,128]{1,0:T(1,128)}', space=vmem, size = 0x9000, scoped, tag = 'internal scratch']
  %s0 = inlined_call_operand.vmem [shape: bf16[8,512], index: 0, kind: input, shape index: {}]
  %s1 = inlined_call_operand.vmem [shape: bf16[512,128], index: 1, kind: input, shape index: {}]
  %s2 = inlined_call_operand.vmem [shape: f32[1,128], index: 2, kind: input, shape index: {}]
  %s3 = inlined_call_operand.vmem [shape: bf16[128,128], index: 3, kind: input, shape index: {}]
  %s4 = inlined_call_operand.vmem [shape: f32[1,128], index: 4, kind: input, shape index: {}]
  %s5 = inlined_call_operand.vmem [shape: bf16[128,128], index: 5, kind: input, shape index: {}]
  %s6 = inlined_call_operand.vmem [shape: f32[1,128], index: 6, kind: input, shape index: {}]
  %s7 = inlined_call_operand.vmem [shape: f32[8,128], index: 7, kind: output, shape index: {}]
  %s8 = sld [smem:[#allocation0]]
  $region38: #{lenet5_forward.5} parent=0
    _
  %s10 = ssub.s32 1, %s8
  %s11 = scalar_select 0, %s10, %s8
  // Predicated region
  $region2: #{lenet5_forward.5} parent=0 // pred_check
    _
  $region3: #{lenet5_forward.5} parent=0 // pred_check_branch
    %13 = sbr.rel (0) target = $region5
  $region4: #{lenet5_forward.5} parent=0 // pred_region
    _
  $region5: #{lenet5_forward.5} parent=0 // pred_fallthru
    _
  // Predicated region
  $region6: #{lenet5_forward.5} parent=0 // pred_check
    _
  $region7: #{lenet5_forward.5} parent=0 // pred_check_branch
    %15 = sbr.rel (0) target = $region9
  $region8: #{lenet5_forward.5} parent=0 // pred_region
    _
  $region9: #{lenet5_forward.5} parent=0 // pred_fallthru
    _
  // Predicated region
  $region10: #{lenet5_forward.5} parent=0 // pred_check
    _
  $region11: #{lenet5_forward.5} parent=0 // pred_check_branch
    %17 = sbr.rel (0) target = $region13
  $region12: #{lenet5_forward.5} parent=0 // pred_region
    _
  $region13: #{lenet5_forward.5} parent=0 // pred_fallthru
    _
  // Predicated region
  $region14: #{lenet5_forward.5} parent=0 // pred_check
    _
  $region15: #{lenet5_forward.5} parent=0 // pred_check_branch
    %19 = sbr.rel (0) target = $region17
  $region16: #{lenet5_forward.5} parent=0 // pred_region
    _
  $region17: #{lenet5_forward.5} parent=0 // pred_fallthru
    _
  // Predicated region
  $region18: #{lenet5_forward.5} parent=0 // pred_check
    _
  $region19: #{lenet5_forward.5} parent=0 // pred_check_branch
    %21 = sbr.rel (0) target = $region21
  $region20: #{lenet5_forward.5} parent=0 // pred_region
    _
  $region21: #{lenet5_forward.5} parent=0 // pred_fallthru
    _
  // Predicated region
  $region22: #{lenet5_forward.5} parent=0 // pred_check
    _
  $region23: #{lenet5_forward.5} parent=0 // pred_check_branch
    %23 = sbr.rel (0) target = $region25
  $region24: #{lenet5_forward.5} parent=0 // pred_region
    _
  $region25: #{lenet5_forward.5} parent=0 // pred_fallthru
    _
  // Predicated region
  $region26: #{lenet5_forward.5} parent=0 // pred_check
    _
  $region27: #{lenet5_forward.5} parent=0 // pred_check_branch
    %25 = sbr.rel (0) target = $region29
  $region28: #{lenet5_forward.5} parent=0 // pred_region
    _
  $region29: #{lenet5_forward.5} parent=0 // pred_fallthru
    _
  %v26 = vld [vmem:[%s0] sm:$0xff]
  %v27 = vld [vmem:[%s0 + $0x8] sm:$0xff]
  %v28 = vld [vmem:[%s1] sm:$0xf]
  %v29 = vld [vmem:[%s1 + $0x4] sm:$0xf]
  %v30 = vld [vmem:[%s1 + $0x8] sm:$0xf]
  %v31 = vld [vmem:[%s1 + $0xc] sm:$0xf]
  %v32 = vld [vmem:[%s1 + $0x10] sm:$0xf]
  %v33 = vld [vmem:[%s1 + $0x14] sm:$0xf]
  %v34 = vld [vmem:[%s1 + $0x18] sm:$0xf]
  %v35 = vld [vmem:[%s1 + $0x1c] sm:$0xf]
  %v36 = vld [vmem:[%s1 + $0x20] sm:$0xf]
  %v37 = vld [vmem:[%s1 + $0x24] sm:$0xf]
  %v38 = vld [vmem:[%s1 + $0x28] sm:$0xf]
  %v39 = vld [vmem:[%s1 + $0x2c] sm:$0xf]
  %v40 = vld [vmem:[%s1 + $0x30] sm:$0xf]
  %v41 = vld [vmem:[%s1 + $0x34] sm:$0xf]
  %v42 = vld [vmem:[%s1 + $0x38] sm:$0xf]
  %v43 = vld [vmem:[%s1 + $0x3c] sm:$0xf]
  %v44 = vld [vmem:[%s1 + $0x40] sm:$0xf]
  %v45 = vld [vmem:[%s1 + $0x44] sm:$0xf]
  %v46 = vld [vmem:[%s1 + $0x48] sm:$0xf]
  %v47 = vld [vmem:[%s1 + $0x4c] sm:$0xf]
  %v48 = vld [vmem:[%s1 + $0x50] sm:$0xf]
  %v49 = vld [vmem:[%s1 + $0x54] sm:$0xf]
  %v50 = vld [vmem:[%s1 + $0x58] sm:$0xf]
  %v51 = vld [vmem:[%s1 + $0x5c] sm:$0xf]
  %v52 = vld [vmem:[%s1 + $0x60] sm:$0xf]
  %v53 = vld [vmem:[%s1 + $0x64] sm:$0xf]
  %v54 = vld [vmem:[%s1 + $0x68] sm:$0xf]
  %v55 = vld [vmem:[%s1 + $0x6c] sm:$0xf]
  %v56 = vld [vmem:[%s1 + $0x70] sm:$0xf]
  %v57 = vld [vmem:[%s1 + $0x74] sm:$0xf]
  %v58 = vld [vmem:[%s1 + $0x78] sm:$0xf]
  %v59 = vld [vmem:[%s1 + $0x7c] sm:$0xf]
  %v60 = vld [vmem:[%s1 + $0x80] sm:$0xf]
  %v61 = vld [vmem:[%s1 + $0x84] sm:$0xf]
  %v62 = vld [vmem:[%s1 + $0x88] sm:$0xf]
  %v63 = vld [vmem:[%s1 + $0x8c] sm:$0xf]
  %v64 = vld [vmem:[%s1 + $0x90] sm:$0xf]
  %v65 = vld [vmem:[%s1 + $0x94] sm:$0xf]
  %v66 = vld [vmem:[%s1 + $0x98] sm:$0xf]
  %v67 = vld [vmem:[%s1 + $0x9c] sm:$0xf]
  %v68 = vld [vmem:[%s1 + $0xa0] sm:$0xf]
  %v69 = vld [vmem:[%s1 + $0xa4] sm:$0xf]
  %v70 = vld [vmem:[%s1 + $0xa8] sm:$0xf]
  %v71 = vld [vmem:[%s1 + $0xac] sm:$0xf]
  %v72 = vld [vmem:[%s1 + $0xb0] sm:$0xf]
  %v73 = vld [vmem:[%s1 + $0xb4] sm:$0xf]
  %v74 = vld [vmem:[%s1 + $0xb8] sm:$0xf]
  %v75 = vld [vmem:[%s1 + $0xbc] sm:$0xf]
  %v76 = vld [vmem:[%s1 + $0xc0] sm:$0xf]
  %v77 = vld [vmem:[%s1 + $0xc4] sm:$0xf]
  %v78 = vld [vmem:[%s1 + $0xc8] sm:$0xf]
  %v79 = vld [vmem:[%s1 + $0xcc] sm:$0xf]
  %v80 = vld [vmem:[%s1 + $0xd0] sm:$0xf]
  %v81 = vld [vmem:[%s1 + $0xd4] sm:$0xf]
  %v82 = vld [vmem:[%s1 + $0xd8] sm:$0xf]
  %v83 = vld [vmem:[%s1 + $0xdc] sm:$0xf]
  %v84 = vld [vmem:[%s1 + $0xe0] sm:$0xf]
  %v85 = vld [vmem:[%s1 + $0xe4] sm:$0xf]
  %v86 = vld [vmem:[%s1 + $0xe8] sm:$0xf]
  %v87 = vld [vmem:[%s1 + $0xec] sm:$0xf]
  %v88 = vld [vmem:[%s1 + $0xf0] sm:$0xf]
  %v89 = vld [vmem:[%s1 + $0xf4] sm:$0xf]
  %v90 = vld [vmem:[%s1 + $0xf8] sm:$0xf]
  %v91 = vld [vmem:[%s1 + $0xfc] sm:$0xf]
  %v92 = vld [vmem:[%s2] sm:$0x1]
  %v94 = vperm.slane %v92, 0
  %v98 = vunpack.c.l.b16 %v26
  %v99 = vunpack.c.h.b16 %v26
  %v100 = vunpack.c.l.b16 %v27
  %v101 = vunpack.c.h.b16 %v27
  %v102 = vpack.c.b16 %v98, %v98
  %v103 = vpack.c.b16 %v99, %v99
  %v104 = vpack.c.b16 %v100, %v100
  %v105 = vpack.c.b16 %v101, %v101
  %v174 = vunpack.c.l.b16 %v28
  %v175 = vunpack.c.l.b16 %v29
  %v176 = vunpack.c.l.b16 %v30
  %v177 = vunpack.c.l.b16 %v31
  %v178 = vunpack.c.l.b16 %v32
  %v179 = vunpack.c.l.b16 %v33
  %v180 = vunpack.c.l.b16 %v34
  %v181 = vunpack.c.l.b16 %v35
  %v182 = vunpack.c.l.b16 %v36
  %v183 = vunpack.c.l.b16 %v37
  %v184 = vunpack.c.l.b16 %v38
  %v185 = vunpack.c.l.b16 %v39
  %v186 = vunpack.c.l.b16 %v40
  %v187 = vunpack.c.l.b16 %v41
  %v188 = vunpack.c.l.b16 %v42
  %v189 = vunpack.c.l.b16 %v43
  %v190 = vunpack.c.l.b16 %v44
  %v191 = vunpack.c.l.b16 %v45
  %v192 = vunpack.c.l.b16 %v46
  %v193 = vunpack.c.l.b16 %v47
  %v194 = vunpack.c.l.b16 %v48
  %v195 = vunpack.c.l.b16 %v49
  %v196 = vunpack.c.l.b16 %v50
  %v197 = vunpack.c.l.b16 %v51
  %v198 = vunpack.c.l.b16 %v52
  %v199 = vunpack.c.l.b16 %v53
  %v200 = vunpack.c.l.b16 %v54
  %v201 = vunpack.c.l.b16 %v55
  %v202 = vunpack.c.l.b16 %v56
  %v203 = vunpack.c.l.b16 %v57
  %v204 = vunpack.c.l.b16 %v58
  %v205 = vunpack.c.l.b16 %v59
  %v206 = vunpack.c.l.b16 %v60
  %v207 = vunpack.c.l.b16 %v61
  %v208 = vunpack.c.l.b16 %v62
  %v209 = vunpack.c.l.b16 %v63
  %v210 = vunpack.c.l.b16 %v64
  %v211 = vunpack.c.l.b16 %v65
  %v212 = vunpack.c.l.b16 %v66
  %v213 = vunpack.c.l.b16 %v67
  %v214 = vunpack.c.l.b16 %v68
  %v215 = vunpack.c.l.b16 %v69
  %v216 = vunpack.c.l.b16 %v70
  %v217 = vunpack.c.l.b16 %v71
  %v218 = vunpack.c.l.b16 %v72
  %v219 = vunpack.c.l.b16 %v73
  %v220 = vunpack.c.l.b16 %v74
  %v221 = vunpack.c.l.b16 %v75
  %v222 = vunpack.c.l.b16 %v76
  %v223 = vunpack.c.l.b16 %v77
  %v224 = vunpack.c.l.b16 %v78
  %v225 = vunpack.c.l.b16 %v79
  %v226 = vunpack.c.l.b16 %v80
  %v227 = vunpack.c.l.b16 %v81
  %v228 = vunpack.c.l.b16 %v82
  %v229 = vunpack.c.l.b16 %v83
  %v230 = vunpack.c.l.b16 %v84
  %v231 = vunpack.c.l.b16 %v85
  %v232 = vunpack.c.l.b16 %v86
  %v233 = vunpack.c.l.b16 %v87
  %v234 = vunpack.c.l.b16 %v88
  %v235 = vunpack.c.l.b16 %v89
  %v236 = vunpack.c.l.b16 %v90
  %v237 = vunpack.c.l.b16 %v91
  %v238 = vpack.c.b16 %v175, %v174
  %v239 = vpack.c.b16 %v177, %v176
  %v240 = vpack.c.b16 %v179, %v178
  %v241 = vpack.c.b16 %v181, %v180
  %v242 = vpack.c.b16 %v183, %v182
  %v243 = vpack.c.b16 %v185, %v184
  %v244 = vpack.c.b16 %v187, %v186
  %v245 = vpack.c.b16 %v189, %v188
  %v246 = vpack.c.b16 %v191, %v190
  %v247 = vpack.c.b16 %v193, %v192
  %v248 = vpack.c.b16 %v195, %v194
  %v249 = vpack.c.b16 %v197, %v196
  %v250 = vpack.c.b16 %v199, %v198
  %v251 = vpack.c.b16 %v201, %v200
  %v252 = vpack.c.b16 %v203, %v202
  %v253 = vpack.c.b16 %v205, %v204
  %v254 = vpack.c.b16 %v207, %v206
  %v255 = vpack.c.b16 %v209, %v208
  %v256 = vpack.c.b16 %v211, %v210
  %v257 = vpack.c.b16 %v213, %v212
  %v258 = vpack.c.b16 %v215, %v214
  %v259 = vpack.c.b16 %v217, %v216
  %v260 = vpack.c.b16 %v219, %v218
  %v261 = vpack.c.b16 %v221, %v220
  %v262 = vpack.c.b16 %v223, %v222
  %v263 = vpack.c.b16 %v225, %v224
  %v264 = vpack.c.b16 %v227, %v226
  %v265 = vpack.c.b16 %v229, %v228
  %v266 = vpack.c.b16 %v231, %v230
  %v267 = vpack.c.b16 %v233, %v232
  %v268 = vpack.c.b16 %v235, %v234
  %v269 = vpack.c.b16 %v237, %v236
  %302 = vmatpush.bf16.msra.mxu0 %v245
  %303 = vmatpush.bf16.msra.mxu0 %v244
  %304 = vmatpush.bf16.msra.mxu0 %v243
  %305 = vmatpush.bf16.msra.mxu0 %v242
  %306 = vmatpush.bf16.msra.mxu0 %v241
  %307 = vmatpush.bf16.msra.mxu0 %v240
  %308 = vmatpush.bf16.msra.mxu0 %v239
  %309 = vmatpush.bf16.msra.mxu0 %v238
  %310 = vmatmul.bf16.gmra.mxu0 %v102
  %v311 = vpop.f32.mrf.mxu0
  %v312 = vadd.f32 %v94, %v311
  %v313 = vpop.f32.mrf.mxu0
  %314 = vdwg.mxu0
  %315 = vmatpush.bf16.msra.mxu0 %v253
  %316 = vmatpush.bf16.msra.mxu0 %v252
  %317 = vmatpush.bf16.msra.mxu0 %v251
  %318 = vmatpush.bf16.msra.mxu0 %v250
  %319 = vmatpush.bf16.msra.mxu0 %v249
  %320 = vmatpush.bf16.msra.mxu0 %v248
  %321 = vmatpush.bf16.msra.mxu0 %v247
  %322 = vmatpush.bf16.msra.mxu0 %v246
  %323 = vmatmul.bf16.gmra.mxu0 %v103
  %v324 = vpop.f32.mrf.mxu0
  %v325 = vadd.f32 %v312, %v324
  %v326 = vpop.f32.mrf.mxu0
  %327 = vdwg.mxu0
  %328 = vmatpush.bf16.msra.mxu0 %v261
  %329 = vmatpush.bf16.msra.mxu0 %v260
  %330 = vmatpush.bf16.msra.mxu0 %v259
  %331 = vmatpush.bf16.msra.mxu0 %v258
  %332 = vmatpush.bf16.msra.mxu0 %v257
  %333 = vmatpush.bf16.msra.mxu0 %v256
  %334 = vmatpush.bf16.msra.mxu0 %v255
  %335 = vmatpush.bf16.msra.mxu0 %v254
  %336 = vmatmul.bf16.gmra.mxu0 %v104
  %v337 = vpop.f32.mrf.mxu0
  %v338 = vadd.f32 %v325, %v337
  %v339 = vpop.f32.mrf.mxu0
  %340 = vdwg.mxu0
  %341 = vmatpush.bf16.msra.mxu0 %v269
  %342 = vmatpush.bf16.msra.mxu0 %v268
  %343 = vmatpush.bf16.msra.mxu0 %v267
  %344 = vmatpush.bf16.msra.mxu0 %v266
  %345 = vmatpush.bf16.msra.mxu0 %v265
  %346 = vmatpush.bf16.msra.mxu0 %v264
  %347 = vmatpush.bf16.msra.mxu0 %v263
  %348 = vmatpush.bf16.msra.mxu0 %v262
  %349 = vmatmul.bf16.gmra.mxu0 %v105
  %v350 = vpop.f32.mrf.mxu0
  %v351 = vadd.f32 %v338, %v350
  %v352 = vpop.f32.mrf.mxu0
  %353 = vdwg.mxu0
  %v354 = vmax.f32 %v351, 0.0
  %v355 = vpack.c.bf16 %v354, %v354
  %v356 = vld [vmem:[%s3] sm:$0xf]
  %v357 = vld [vmem:[%s3 + $0x4] sm:$0xf]
  %v358 = vld [vmem:[%s3 + $0x8] sm:$0xf]
  %v359 = vld [vmem:[%s3 + $0xc] sm:$0xf]
  %v360 = vld [vmem:[%s3 + $0x10] sm:$0xf]
  %v361 = vld [vmem:[%s3 + $0x14] sm:$0xf]
  %v362 = vld [vmem:[%s3 + $0x18] sm:$0xf]
  %v363 = vld [vmem:[%s3 + $0x1c] sm:$0xf]
  %v364 = vld [vmem:[%s3 + $0x20] sm:$0xf]
  %v365 = vld [vmem:[%s3 + $0x24] sm:$0xf]
  %v366 = vld [vmem:[%s3 + $0x28] sm:$0xf]
  %v367 = vld [vmem:[%s3 + $0x2c] sm:$0xf]
  %v368 = vld [vmem:[%s3 + $0x30] sm:$0xf]
  %v369 = vld [vmem:[%s3 + $0x34] sm:$0xf]
  %v370 = vld [vmem:[%s3 + $0x38] sm:$0xf]
  %v371 = vld [vmem:[%s3 + $0x3c] sm:$0xf]
  %v372 = vld [vmem:[%s4] sm:$0x1]
  %v374 = vperm.slane %v372, 0
  %v392 = vunpack.c.l.b16 %v356
  %v393 = vunpack.c.l.b16 %v357
  %v394 = vunpack.c.l.b16 %v358
  %v395 = vunpack.c.l.b16 %v359
  %v396 = vunpack.c.l.b16 %v360
  %v397 = vunpack.c.l.b16 %v361
  %v398 = vunpack.c.l.b16 %v362
  %v399 = vunpack.c.l.b16 %v363
  %v400 = vunpack.c.l.b16 %v364
  %v401 = vunpack.c.l.b16 %v365
  %v402 = vunpack.c.l.b16 %v366
  %v403 = vunpack.c.l.b16 %v367
  %v404 = vunpack.c.l.b16 %v368
  %v405 = vunpack.c.l.b16 %v369
  %v406 = vunpack.c.l.b16 %v370
  %v407 = vunpack.c.l.b16 %v371
  %v408 = vpack.c.b16 %v393, %v392
  %v409 = vpack.c.b16 %v395, %v394
  %v410 = vpack.c.b16 %v397, %v396
  %v411 = vpack.c.b16 %v399, %v398
  %v412 = vpack.c.b16 %v401, %v400
  %v413 = vpack.c.b16 %v403, %v402
  %v414 = vpack.c.b16 %v405, %v404
  %v415 = vpack.c.b16 %v407, %v406
  %424 = vmatpush.bf16.msra.mxu0 %v415
  %425 = vmatpush.bf16.msra.mxu0 %v414
  %426 = vmatpush.bf16.msra.mxu0 %v413
  %427 = vmatpush.bf16.msra.mxu0 %v412
  %428 = vmatpush.bf16.msra.mxu0 %v411
  %429 = vmatpush.bf16.msra.mxu0 %v410
  %430 = vmatpush.bf16.msra.mxu0 %v409
  %431 = vmatpush.bf16.msra.mxu0 %v408
  %432 = vmatmul.bf16.gmra.mxu0 %v355
  %v433 = vpop.f32.mrf.mxu0
  %v434 = vadd.f32 %v374, %v433
  %v435 = vpop.f32.mrf.mxu0
  %436 = vdwg.mxu0
  %v437 = vmax.f32 %v434, 0.0
  %v438 = vpack.c.bf16 %v437, %v437
  %v439 = vld [vmem:[%s5] sm:$0xf]
  %v440 = vld [vmem:[%s5 + $0x4] sm:$0xf]
  %v441 = vld [vmem:[%s5 + $0x8] sm:$0xf]
  %v442 = vld [vmem:[%s5 + $0xc] sm:$0xf]
  %v443 = vld [vmem:[%s5 + $0x10] sm:$0xf]
  %v444 = vld [vmem:[%s5 + $0x14] sm:$0xf]
  %v445 = vld [vmem:[%s5 + $0x18] sm:$0xf]
  %v446 = vld [vmem:[%s5 + $0x1c] sm:$0xf]
  %v447 = vld [vmem:[%s5 + $0x20] sm:$0xf]
  %v448 = vld [vmem:[%s5 + $0x24] sm:$0xf]
  %v449 = vld [vmem:[%s5 + $0x28] sm:$0xf]
  %v450 = vld [vmem:[%s5 + $0x2c] sm:$0xf]
  %v451 = vld [vmem:[%s5 + $0x30] sm:$0xf]
  %v452 = vld [vmem:[%s5 + $0x34] sm:$0xf]
  %v453 = vld [vmem:[%s5 + $0x38] sm:$0xf]
  %v454 = vld [vmem:[%s5 + $0x3c] sm:$0xf]
  %v455 = vld [vmem:[%s6] sm:$0x1]
  %v457 = vperm.slane %v455, 0
  %v475 = vunpack.c.l.b16 %v439
  %v476 = vunpack.c.l.b16 %v440
  %v477 = vunpack.c.l.b16 %v441
  %v478 = vunpack.c.l.b16 %v442
  %v479 = vunpack.c.l.b16 %v443
  %v480 = vunpack.c.l.b16 %v444
  %v481 = vunpack.c.l.b16 %v445
  %v482 = vunpack.c.l.b16 %v446
  %v483 = vunpack.c.l.b16 %v447
  %v484 = vunpack.c.l.b16 %v448
  %v485 = vunpack.c.l.b16 %v449
  %v486 = vunpack.c.l.b16 %v450
  %v487 = vunpack.c.l.b16 %v451
  %v488 = vunpack.c.l.b16 %v452
  %v489 = vunpack.c.l.b16 %v453
  %v490 = vunpack.c.l.b16 %v454
  %v491 = vpack.c.b16 %v476, %v475
  %v492 = vpack.c.b16 %v478, %v477
  %v493 = vpack.c.b16 %v480, %v479
  %v494 = vpack.c.b16 %v482, %v481
  %v495 = vpack.c.b16 %v484, %v483
  %v496 = vpack.c.b16 %v486, %v485
  %v497 = vpack.c.b16 %v488, %v487
  %v498 = vpack.c.b16 %v490, %v489
  %507 = vmatpush.bf16.msra.mxu0 %v498
  %508 = vmatpush.bf16.msra.mxu0 %v497
  %509 = vmatpush.bf16.msra.mxu0 %v496
  %510 = vmatpush.bf16.msra.mxu0 %v495
  %511 = vmatpush.bf16.msra.mxu0 %v494
  %512 = vmatpush.bf16.msra.mxu0 %v493
  %513 = vmatpush.bf16.msra.mxu0 %v492
  %514 = vmatpush.bf16.msra.mxu0 %v491
  %515 = vmatmul.bf16.gmra.mxu0 %v438
  %v516 = vpop.f32.mrf.mxu0
  %v517 = vadd.f32 %v457, %v516
  %v518 = vpop.f32.mrf.mxu0
  %519 = vdwg.mxu0
  %520 = vst [vmem:[%s7] sm:$0xff] %v517
  // Predicated region
  $region30: #{lenet5_forward.5} parent=0 // pred_check
    _
  $region31: #{lenet5_forward.5} parent=0 // pred_check_branch
    %522 = sbr.rel (0) target = $region33
  $region32: #{lenet5_forward.5} parent=0 // pred_region
    _
  $region33: #{lenet5_forward.5} parent=0 // pred_fallthru
    _
  // Predicated region
  $region34: #{lenet5_forward.5} parent=0 // pred_check
    _
  $region35: #{lenet5_forward.5} parent=0 // pred_check_branch
    %524 = sbr.rel (0) target = $region37
  $region36: #{lenet5_forward.5} parent=0 // pred_region
    _
  $region37: #{lenet5_forward.5} parent=0 // pred_fallthru
    _

</llo_original>
